<compile_context>
chip_gen: v7x
topology: tpu7x:2x2x1
jax: 0.10.0
libtpu: 0.0.40
codegen_flags: <defaults>
</compile_context>

<pallas_src>
import functools

import numpy as np
import jax
import jax.numpy as jnp
from jax import lax
from jax.experimental import pallas as pl
from jax.experimental.pallas import tpu as pltpu


# ----------------------------- Pallas kernel --------------------------------

def dicnn_kernel(x_ref, w1_ref, w2_ref, w3_ref, b_ref, o_ref, mid_ref, *,
                 cpad, lp, l_real, bpads):
    f32 = jnp.float32
    x = x_ref[...]                                   # (cpad, NB*lp), bf16
    ln = x.shape[1]
    cdt = x.dtype

    # Hoisted periodic validity mask: within each sample's lp-wide lane slot
    # only the first l_real columns are real.  It is applied to the *inputs*
    # of the next conv level so chained convs see exact zero padding (the tap
    # rolls may drag non-zero values into columns >= l_real; those must not
    # leak forward).
    lane = lax.broadcasted_iota(jnp.int32, (cpad, ln), 1)
    valid = (lane % lp) < l_real

    def align(z, head, dil, bias):
        # z packs 3 taps per head along rows: tap k of head h lives in rows
        # [(3*h+k)*cpad, (3*h+k+1)*cpad).  Zero-padded dilated conv:
        #     y[l] = z1[l] + z0[l - dil] + z2[l + dil]
        # Because lp >= l_real + dil and every conv input has exact zero tails,
        # the roll wrap-around only moves zeros into real columns; garbage it
        # moves into columns >= l_real is killed by `valid` / wrapper slicing.
        base = 3 * head * cpad
        z0 = z[base + 0 * cpad:base + 1 * cpad]
        z1 = z[base + 1 * cpad:base + 2 * cpad]
        z2 = z[base + 2 * cpad:base + 3 * cpad]
        return (z1
                + pltpu.roll(z0, dil, axis=1)           # z0[l - dil]
                + pltpu.roll(z2, ln - dil, axis=1)      # z2[l + dil]
                + bias)

    # ---- level 1: the four first convs of all branches, fused (1 matmul) ----
    z = jnp.dot(w1_ref[...], x, preferred_element_type=f32)     # (12*cpad, ln)
    y1  = align(z, 0, 1, b_ref[0])    # branch 1 conv (BN folded) -> terminal
    y2a = align(z, 1, 1, b_ref[1])    # branch 2 conv a
    y3a = align(z, 2, 2, b_ref[2])    # branch 3 conv a
    y4a = align(z, 3, 1, b_ref[3])    # branch 4 conv a

    # ---- level 2: branch 2/3/4 second convs, block-diagonal fused (1 matmul)
    mid_ref[0 * cpad:1 * cpad, :] = jnp.where(valid, y2a, 0.0).astype(cdt)
    mid_ref[1 * cpad:2 * cpad, :] = jnp.where(valid, y3a, 0.0).astype(cdt)
    mid_ref[2 * cpad:3 * cpad, :] = jnp.where(valid, y4a, 0.0).astype(cdt)
    z = jnp.dot(w2_ref[...], mid_ref[...],
                preferred_element_type=f32)                     # (9*cpad, ln)
    y2  = align(z, 0, 1, b_ref[4])    # branch 2 conv b (BN folded) -> terminal
    y3  = align(z, 1, 2, b_ref[5])    # branch 3 conv b (BN folded) -> terminal
    y4b = align(z, 2, 2, b_ref[6])    # branch 4 conv b

    # ---- level 3: branch 4 third conv (1 matmul) ----
    z = jnp.dot(w3_ref[...], jnp.where(valid, y4b, 0.0).astype(cdt),
                preferred_element_type=f32)                     # (3*cpad, ln)
    y4 = align(z, 0, 2, b_ref[7])     # branch 4 conv c (BN folded) -> terminal

    # ---- ReLU + store (lane-dense, sublane-aligned slices, no tail mask:
    #      padded columns/channels are discarded by the wrapper) ----
    off = 0
    for y, bp in zip((y1, y2, y3, y4), bpads):
        o_ref[off:off + bp, :] = jnp.maximum(y[:bp, :], 0.0)
        off += bp


# ------------------------------ wrapper --------------------------------------

def _round_up(v, m):
    return (v + m - 1) // m * m


def _pick_nb(n, lp, max_lanes=512):
    """Largest divisor of n with nb*lp <= max_lanes lanes per grid step."""
    nb = max(1, min(n, max_lanes // lp))
    while n % nb:
        nb -= 1
    return nb


def dicnn_block_pallas(x_ncl, w1, w2, w3, b_slab, branch_channels):
    """x_ncl: (N, Cin, L) float32 -> (N, sum(branch_channels), L) float32."""
    n, cin, l = x_ncl.shape
    cpad = w1.shape[1]
    cdt = w1.dtype
    bpads = tuple(_round_up(c, 8) for c in branch_channels)
    cout_pad = sum(bpads)

    # lp >= L + 2 (max dilation) so the roll-based tap alignment needs no edge
    # masks; lane-dense multiple of 128.
    lp = _round_up(l + 2, 128)
    nb = _pick_nb(n, lp)              # samples folded into the lane axis
    ngrp = n // nb
    nbl = nb * lp

    # (N, Cin, L) -> (ngrp, cpad, nb*lp): channels on sublanes, samples*length
    # on lanes.  The zero tails are load-bearing: they are the conv padding.
    xg = jnp.swapaxes(x_ncl.reshape(ngrp, nb, cin, l), 1, 2).astype(cdt)
    xp = jnp.zeros((ngrp, cpad, nb, lp), cdt).at[:, :cin, :, :l].set(xg)
    xp = xp.reshape(ngrp, cpad, nbl)

    kernel = functools.partial(
        dicnn_kernel, cpad=cpad, lp=lp, l_real=l, bpads=bpads)

    out = pl.pallas_call(
        kernel,
        out_shape=jax.ShapeDtypeStruct((ngrp, cout_pad, nbl), jnp.float32),
        grid_spec=pltpu.PrefetchScalarGridSpec(
            num_scalar_prefetch=0,
            grid=(ngrp,),
            in_specs=[
                pl.BlockSpec((None, cpad, nbl), lambda i: (i, 0, 0)),
                # weight / bias slabs: constant index_map (same block every step)
                pl.BlockSpec(w1.shape, lambda i: (0, 0)),
                pl.BlockSpec(w2.shape, lambda i: (0, 0)),
                pl.BlockSpec(w3.shape, lambda i: (0, 0)),
                pl.BlockSpec(b_slab.shape, lambda i: (0, 0, 0)),
            ],
            out_specs=pl.BlockSpec((None, cout_pad, nbl), lambda i: (i, 0, 0)),
            scratch_shapes=[pltpu.VMEM((3 * cpad, nbl), cdt)],
        ),
        compiler_params=pltpu.CompilerParams(
            dimension_semantics=("parallel",)),
    )(xp, w1, w2, w3, b_slab)

    # undo lane folding, drop padded length and padded branch channels
    out = jnp.swapaxes(out.reshape(ngrp, cout_pad, nb, lp), 1, 2)
    out = out.reshape(n, cout_pad, lp)[:, :, :l]
    pieces, off = [], 0
    for bc, bp in zip(branch_channels, bpads):
        pieces.append(out[:, off:off + bc, :])
        off += bp
    return jnp.concatenate(pieces, axis=1)


# ------------------------- parameter construction ----------------------------

def make_conv(key, cin, cout):
    kw, kb = jax.random.split(key)
    w = 0.3 * jax.random.normal(kw, (cout, cin, 3), jnp.float32)  # PyTorch (O,I,K)
    b = 0.1 * jax.random.normal(kb, (cout,), jnp.float32)
    return w, b


def make_bn(key, c):
    k1, k2, k3, k4 = jax.random.split(key, 4)
    gamma = 1.0 + 0.1 * jax.random.normal(k1, (c,), jnp.float32)
    beta = 0.1 * jax.random.normal(k2, (c,), jnp.float32)
    mean = 0.1 * jax.random.normal(k3, (c,), jnp.float32)
    var = jnp.abs(jax.random.normal(k4, (c,), jnp.float32)) + 0.5
    return gamma, beta, mean, var


def fold_bn(w, b, bn, eps=1e-5):
    gamma, beta, mean, var = bn
    scale = gamma / jnp.sqrt(var + eps)
    return w * scale[:, None, None], b * scale + beta - mean * scale


def pack_tap_slab(convs, col_offsets, n_cols, cpad, dtype):
    """Stack convs' 3 taps along rows: head h, tap k -> rows [(3h+k)*cpad, ..).
    Conv h contracts against input channels at columns [col_offsets[h], +Cin_h)."""
    W = np.zeros((len(convs) * 3 * cpad, n_cols), np.float32)
    for h, ((w, _), coff) in enumerate(zip(convs, col_offsets)):
        w = np.asarray(w)
        cout, cin, _ = w.shape
        for k in range(3):
            r = (3 * h + k) * cpad
            W[r:r + cout, coff:coff + cin] = w[:, :, k]
    return jnp.asarray(W, dtype)


def pack_bias_slab(convs, cpad):
    B = np.zeros((len(convs), cpad, 1), np.float32)
    for i, (_, b) in enumerate(convs):
        b = np.asarray(b)
        B[i, :b.shape[0], 0] = b
    return jnp.asarray(B)


# ------------------------------ reference ------------------------------------

def conv1d_ref(x, w, b, dil):
    y = lax.conv_general_dilated(
        x, w, window_strides=(1,), padding=[(dil, dil)], rhs_dilation=(dil,),
        dimension_numbers=('NCH', 'OIH', 'NCH'))
    return y + b[None, :, None]


def bn_relu_ref(x, bn, eps=1e-5):
    gamma, beta, mean, var = bn
    scale = (gamma / jnp.sqrt(var + eps))[None, :, None]
    return jnp.maximum(scale * (x - mean[None, :, None]) + beta[None, :, None], 0.0)


# --------------------------------- main ---------------------------------------

if __name__ == "__main__":
    N, Cin, L = 8, 4, 16
    b1 = b2 = b3 = b4 = 8
    branch_channels = (b1, b2, b3, b4)
    ctot = sum(branch_channels)
    compute_dtype = jnp.bfloat16     # MXU inputs; accumulation stays f32

    root = jax.random.PRNGKey(0)
    keys = jax.random.split(root, 16)

    x = jax.random.normal(keys[0], (N, Cin, L), jnp.float32)

    # raw conv / BN parameters (deterministic)
    c1a = make_conv(keys[1], Cin, b1)
    c2a = make_conv(keys[2], Cin, b2)
    c2b = make_conv(keys[3], b2, b2)
    c3a = make_conv(keys[4], Cin, b3)
    c3b = make_conv(keys[5], b3, b3)
    c4a = make_conv(keys[6], Cin, b4)
    c4b = make_conv(keys[7], b4, b4)
    c4c = make_conv(keys[8], b4, b4)
    bn1 = make_bn(keys[9], b1)
    bn2 = make_bn(keys[10], b2)
    bn3 = make_bn(keys[11], b3)
    bn4 = make_bn(keys[12], b4)

    # fold BN (eval mode) into the LAST conv of each branch
    f1a = fold_bn(*c1a, bn1)
    f2b = fold_bn(*c2b, bn2)
    f3b = fold_bn(*c3b, bn3)
    f4c = fold_bn(*c4c, bn4)

    # bf16 sublane packing -> round channel pad to 16
    cpad = _round_up(max(Cin, b1, b2, b3, b4), 16)

    # level 1: the 4 first convs (all consume x)      -> (12*cpad, cpad)
    w1 = pack_tap_slab([f1a, c2a, c3a, c4a], [0, 0, 0, 0],
                       cpad, cpad, compute_dtype)
    # level 2: branch 2/3/4 second convs, block-diag  -> (9*cpad, 3*cpad)
    w2 = pack_tap_slab([f2b, f3b, c4b], [0, cpad, 2 * cpad],
                       3 * cpad, cpad, compute_dtype)
    # level 3: branch 4 third conv                    -> (3*cpad, cpad)
    w3 = pack_tap_slab([f4c], [0], cpad, cpad, compute_dtype)
    # biases (f32), order matches kernel's b_ref indices 0..7
    b_slab = pack_bias_slab([f1a, c2a, c3a, c4a, f2b, f3b, c4b, f4c], cpad)

    out = dicnn_block_pallas(x, w1, w2, w3, b_slab, branch_channels)
    out = jax.block_until_ready(out)

    # pure-JAX f32 reference (eval-mode BN), mirrors the PyTorch forward
    r3 = bn_relu_ref(conv1d_ref(x, *c1a, 1), bn1)
    r5 = bn_relu_ref(conv1d_ref(conv1d_ref(x, *c2a, 1), *c2b, 1), bn2)
    r9 = bn_relu_ref(conv1d_ref(conv1d_ref(x, *c3a, 2), *c3b, 2), bn3)
    r11 = bn_relu_ref(
        conv1d_ref(conv1d_ref(conv1d_ref(x, *c4a, 1), *c4b, 2), *c4c, 2), bn4)
    ref = jnp.concatenate([r3, r5, r9, r11], axis=1)

    # bf16 MXU inputs vs. f32 reference -> relaxed tolerance
    np.testing.assert_allclose(np.asarray(out), np.asarray(ref),
                               rtol=5e-2, atol=5e-2)
    assert out.shape == (N, ctot, L)
    print("KERNEL_OK")
</pallas_src>

<mosaic_0001>
module attributes {stable_mosaic.version = 11 : i64} {
  func.func @dicnn_kernel(%arg0: i32, %arg1: memref<1x16x512xbf16, #tpu.memory_space<vmem>>, %arg2: memref<192x16xbf16, #tpu.memory_space<vmem>>, %arg3: memref<144x48xbf16, #tpu.memory_space<vmem>>, %arg4: memref<48x16xbf16, #tpu.memory_space<vmem>>, %arg5: memref<8x16x1xf32, #tpu.memory_space<vmem>>, %arg6: memref<1x32x512xf32, #tpu.memory_space<vmem>>, %arg7: memref<48x512xbf16, #tpu.memory_space<vmem>>) attributes {dimension_semantics = [#tpu.dimension_semantics<parallel>], iteration_bounds = array<i64: 2>, scalar_prefetch = 0 : i64, scratch_operands = 1 : i64, tpu.core_type = #tpu.core_type<tc>, window_params = [{transform_indices = @transform_0, window_bounds = array<i64: 1, 16, 512>}, {pipeline_mode = #tpu.pipeline_mode<synchronous>, transform_indices = @transform_1, window_bounds = array<i64: 192, 16>}, {pipeline_mode = #tpu.pipeline_mode<synchronous>, transform_indices = @transform_2, window_bounds = array<i64: 144, 48>}, {pipeline_mode = #tpu.pipeline_mode<synchronous>, transform_indices = @transform_3, window_bounds = array<i64: 48, 16>}, {pipeline_mode = #tpu.pipeline_mode<synchronous>, transform_indices = @transform_4, window_bounds = array<i64: 8, 16, 1>}, {transform_indices = @transform_5, window_bounds = array<i64: 1, 32, 512>}]} {
    %c0 = arith.constant 0 : index
    %c0_0 = arith.constant 0 : index
    %c0_1 = arith.constant 0 : index
    %0 = vector.load %arg1[%c0, %c0_0, %c0_1] : memref<1x16x512xbf16, #tpu.memory_space<vmem>>, vector<1x16x512xbf16>
    %1 = vector.shape_cast %0 : vector<1x16x512xbf16> to vector<16x512xbf16>
    %2 = tpu.iota {dimensions = array<i32: 1>} : vector<16x512xi32>
    %c128_i32 = arith.constant 128 : i32
    %c0_i32 = arith.constant 0 : i32
    %3 = arith.cmpi eq, %c128_i32, %c0_i32 : i32
    %c1_i32 = arith.constant 1 : i32
    %4 = arith.select %3, %c1_i32, %c128_i32 : i32
    %5 = vector.broadcast %4 : i32 to vector<16x512xi32>
    %6 = arith.remsi %2, %5 : vector<16x512xi32>
    %c0_i32_2 = arith.constant 0 : i32
    %7 = vector.broadcast %c0_i32_2 : i32 to vector<16x512xi32>
    %8 = arith.cmpi ne, %6, %7 : vector<16x512xi32>
    %c0_i32_3 = arith.constant 0 : i32
    %9 = vector.broadcast %c0_i32_3 : i32 to vector<16x512xi32>
    %10 = arith.cmpi slt, %6, %9 : vector<16x512xi32>
    %c0_i32_4 = arith.constant 0 : i32
    %11 = arith.cmpi slt, %4, %c0_i32_4 : i32
    %12 = vector.broadcast %11 : i1 to vector<16x512xi1>
    %13 = vector.broadcast %12 : vector<16x512xi1> to vector<16x512xi1>
    %14 = arith.xori %10, %13 : vector<16x512xi1>
    %15 = arith.andi %14, %8 : vector<16x512xi1>
    %16 = vector.broadcast %4 : i32 to vector<16x512xi32>
    %17 = arith.addi %6, %16 : vector<16x512xi32>
    %18 = arith.select %15, %17, %6 : vector<16x512xi1>, vector<16x512xi32>
    %c16_i32 = arith.constant 16 : i32
    %19 = vector.broadcast %c16_i32 : i32 to vector<16x512xi32>
    %20 = arith.cmpi slt, %18, %19 : vector<16x512xi32>
    %c0_5 = arith.constant 0 : index
    %c0_6 = arith.constant 0 : index
    %21 = vector.load %arg2[%c0_5, %c0_6] : memref<192x16xbf16, #tpu.memory_space<vmem>>, vector<192x16xbf16>
    %cst = arith.constant dense<0.000000e+00> : vector<192x512xf32>
    %22 = tpu.matmul %21, %1, %cst {dimension_numbers = #tpu.dot_dimension_numbers<[1], [0], [0], [1], [0, 0, 1, 1], [], []>} : vector<192x16xbf16>, vector<16x512xbf16>, vector<192x512xf32> -> vector<192x512xf32>
    %c0_7 = arith.constant 0 : index
    %c0_8 = arith.constant 0 : index
    %c0_9 = arith.constant 0 : index
    %23 = vector.load %arg5[%c0_7, %c0_8, %c0_9] : memref<8x16x1xf32, #tpu.memory_space<vmem>>, vector<1x16x1xf32>
    %24 = vector.shape_cast %23 : vector<1x16x1xf32> to vector<16x1xf32>
    %25 = vector.extract_strided_slice %22 {offsets = [0, 0], sizes = [16, 512], strides = [1, 1]} : vector<192x512xf32> to vector<16x512xf32>
    %26 = vector.extract_strided_slice %22 {offsets = [16, 0], sizes = [16, 512], strides = [1, 1]} : vector<192x512xf32> to vector<16x512xf32>
    %27 = vector.extract_strided_slice %22 {offsets = [32, 0], sizes = [16, 512], strides = [1, 1]} : vector<192x512xf32> to vector<16x512xf32>
    %c1_i32_10 = arith.constant 1 : i32
    %28 = tpu.dynamic_rotate %25 by %c1_i32_10 dim 1 : vector<16x512xf32>, i32 -> vector<16x512xf32>
    %29 = arith.addf %26, %28 : vector<16x512xf32>
    %c511_i32 = arith.constant 511 : i32
    %30 = tpu.dynamic_rotate %27 by %c511_i32 dim 1 : vector<16x512xf32>, i32 -> vector<16x512xf32>
    %31 = arith.addf %29, %30 : vector<16x512xf32>
    %32 = vector.broadcast %24 : vector<16x1xf32> to vector<16x512xf32>
    %33 = arith.addf %31, %32 : vector<16x512xf32>
    %c1 = arith.constant 1 : index
    %c0_11 = arith.constant 0 : index
    %c0_12 = arith.constant 0 : index
    %34 = vector.load %arg5[%c1, %c0_11, %c0_12] : memref<8x16x1xf32, #tpu.memory_space<vmem>>, vector<1x16x1xf32>
    %35 = vector.shape_cast %34 : vector<1x16x1xf32> to vector<16x1xf32>
    %36 = vector.extract_strided_slice %22 {offsets = [48, 0], sizes = [16, 512], strides = [1, 1]} : vector<192x512xf32> to vector<16x512xf32>
    %37 = vector.extract_strided_slice %22 {offsets = [64, 0], sizes = [16, 512], strides = [1, 1]} : vector<192x512xf32> to vector<16x512xf32>
    %38 = vector.extract_strided_slice %22 {offsets = [80, 0], sizes = [16, 512], strides = [1, 1]} : vector<192x512xf32> to vector<16x512xf32>
    %c1_i32_13 = arith.constant 1 : i32
    %39 = tpu.dynamic_rotate %36 by %c1_i32_13 dim 1 : vector<16x512xf32>, i32 -> vector<16x512xf32>
    %40 = arith.addf %37, %39 : vector<16x512xf32>
    %c511_i32_14 = arith.constant 511 : i32
    %41 = tpu.dynamic_rotate %38 by %c511_i32_14 dim 1 : vector<16x512xf32>, i32 -> vector<16x512xf32>
    %42 = arith.addf %40, %41 : vector<16x512xf32>
    %43 = vector.broadcast %35 : vector<16x1xf32> to vector<16x512xf32>
    %44 = arith.addf %42, %43 : vector<16x512xf32>
    %c2 = arith.constant 2 : index
    %c0_15 = arith.constant 0 : index
    %c0_16 = arith.constant 0 : index
    %45 = vector.load %arg5[%c2, %c0_15, %c0_16] : memref<8x16x1xf32, #tpu.memory_space<vmem>>, vector<1x16x1xf32>
    %46 = vector.shape_cast %45 : vector<1x16x1xf32> to vector<16x1xf32>
    %47 = vector.extract_strided_slice %22 {offsets = [96, 0], sizes = [16, 512], strides = [1, 1]} : vector<192x512xf32> to vector<16x512xf32>
    %48 = vector.extract_strided_slice %22 {offsets = [112, 0], sizes = [16, 512], strides = [1, 1]} : vector<192x512xf32> to vector<16x512xf32>
    %49 = vector.extract_strided_slice %22 {offsets = [128, 0], sizes = [16, 512], strides = [1, 1]} : vector<192x512xf32> to vector<16x512xf32>
    %c2_i32 = arith.constant 2 : i32
    %50 = tpu.dynamic_rotate %47 by %c2_i32 dim 1 : vector<16x512xf32>, i32 -> vector<16x512xf32>
    %51 = arith.addf %48, %50 : vector<16x512xf32>
    %c510_i32 = arith.constant 510 : i32
    %52 = tpu.dynamic_rotate %49 by %c510_i32 dim 1 : vector<16x512xf32>, i32 -> vector<16x512xf32>
    %53 = arith.addf %51, %52 : vector<16x512xf32>
    %54 = vector.broadcast %46 : vector<16x1xf32> to vector<16x512xf32>
    %55 = arith.addf %53, %54 : vector<16x512xf32>
    %c3 = arith.constant 3 : index
    %c0_17 = arith.constant 0 : index
    %c0_18 = arith.constant 0 : index
    %56 = vector.load %arg5[%c3, %c0_17, %c0_18] : memref<8x16x1xf32, #tpu.memory_space<vmem>>, vector<1x16x1xf32>
    %57 = vector.shape_cast %56 : vector<1x16x1xf32> to vector<16x1xf32>
    %58 = vector.extract_strided_slice %22 {offsets = [144, 0], sizes = [16, 512], strides = [1, 1]} : vector<192x512xf32> to vector<16x512xf32>
    %59 = vector.extract_strided_slice %22 {offsets = [160, 0], sizes = [16, 512], strides = [1, 1]} : vector<192x512xf32> to vector<16x512xf32>
    %60 = vector.extract_strided_slice %22 {offsets = [176, 0], sizes = [16, 512], strides = [1, 1]} : vector<192x512xf32> to vector<16x512xf32>
    %c1_i32_19 = arith.constant 1 : i32
    %61 = tpu.dynamic_rotate %58 by %c1_i32_19 dim 1 : vector<16x512xf32>, i32 -> vector<16x512xf32>
    %62 = arith.addf %59, %61 : vector<16x512xf32>
    %c511_i32_20 = arith.constant 511 : i32
    %63 = tpu.dynamic_rotate %60 by %c511_i32_20 dim 1 : vector<16x512xf32>, i32 -> vector<16x512xf32>
    %64 = arith.addf %62, %63 : vector<16x512xf32>
    %65 = vector.broadcast %57 : vector<16x1xf32> to vector<16x512xf32>
    %66 = arith.addf %64, %65 : vector<16x512xf32>
    %cst_21 = arith.constant 0.000000e+00 : f32
    %67 = vector.broadcast %cst_21 : f32 to vector<16x512xf32>
    %68 = arith.select %20, %44, %67 : vector<16x512xi1>, vector<16x512xf32>
    %69 = arith.truncf %68 : vector<16x512xf32> to vector<16x512xbf16>
    %c0_22 = arith.constant 0 : index
    %c0_23 = arith.constant 0 : index
    %70 = vector.load %arg7[%c0_22, %c0_23] : memref<48x512xbf16, #tpu.memory_space<vmem>>, vector<16x512xbf16>
    tpu.vector_store %arg7[%c0_22, %c0_23], %69 {strides = array<i32>} : memref<48x512xbf16, #tpu.memory_space<vmem>>, vector<16x512xbf16>,
    %cst_24 = arith.constant 0.000000e+00 : f32
    %71 = vector.broadcast %cst_24 : f32 to vector<16x512xf32>
    %72 = arith.select %20, %55, %71 : vector<16x512xi1>, vector<16x512xf32>
    %73 = arith.truncf %72 : vector<16x512xf32> to vector<16x512xbf16>
    %c16 = arith.constant 16 : index
    %c0_25 = arith.constant 0 : index
    %74 = vector.load %arg7[%c16, %c0_25] : memref<48x512xbf16, #tpu.memory_space<vmem>>, vector<16x512xbf16>
    tpu.vector_store %arg7[%c16, %c0_25], %73 {strides = array<i32>} : memref<48x512xbf16, #tpu.memory_space<vmem>>, vector<16x512xbf16>,
    %cst_26 = arith.constant 0.000000e+00 : f32
    %75 = vector.broadcast %cst_26 : f32 to vector<16x512xf32>
    %76 = arith.select %20, %66, %75 : vector<16x512xi1>, vector<16x512xf32>
    %77 = arith.truncf %76 : vector<16x512xf32> to vector<16x512xbf16>
    %c32 = arith.constant 32 : index
    %c0_27 = arith.constant 0 : index
    %78 = vector.load %arg7[%c32, %c0_27] : memref<48x512xbf16, #tpu.memory_space<vmem>>, vector<16x512xbf16>
    tpu.vector_store %arg7[%c32, %c0_27], %77 {strides = array<i32>} : memref<48x512xbf16, #tpu.memory_space<vmem>>, vector<16x512xbf16>,
    %c0_28 = arith.constant 0 : index
    %c0_29 = arith.constant 0 : index
    %79 = vector.load %arg3[%c0_28, %c0_29] : memref<144x48xbf16, #tpu.memory_space<vmem>>, vector<144x48xbf16>
    %c0_30 = arith.constant 0 : index
    %c0_31 = arith.constant 0 : index
    %80 = vector.load %arg7[%c0_30, %c0_31] : memref<48x512xbf16, #tpu.memory_space<vmem>>, vector<48x512xbf16>
    %cst_32 = arith.constant dense<0.000000e+00> : vector<144x512xf32>
    %81 = tpu.matmul %79, %80, %cst_32 {dimension_numbers = #tpu.dot_dimension_numbers<[1], [0], [0], [1], [0, 0, 1, 1], [], []>} : vector<144x48xbf16>, vector<48x512xbf16>, vector<144x512xf32> -> vector<144x512xf32>
    %c4 = arith.constant 4 : index
    %c0_33 = arith.constant 0 : index
    %c0_34 = arith.constant 0 : index
    %82 = vector.load %arg5[%c4, %c0_33, %c0_34] : memref<8x16x1xf32, #tpu.memory_space<vmem>>, vector<1x16x1xf32>
    %83 = vector.shape_cast %82 : vector<1x16x1xf32> to vector<16x1xf32>
    %84 = vector.extract_strided_slice %81 {offsets = [0, 0], sizes = [16, 512], strides = [1, 1]} : vector<144x512xf32> to vector<16x512xf32>
    %85 = vector.extract_strided_slice %81 {offsets = [16, 0], sizes = [16, 512], strides = [1, 1]} : vector<144x512xf32> to vector<16x512xf32>
    %86 = vector.extract_strided_slice %81 {offsets = [32, 0], sizes = [16, 512], strides = [1, 1]} : vector<144x512xf32> to vector<16x512xf32>
    %c1_i32_35 = arith.constant 1 : i32
    %87 = tpu.dynamic_rotate %84 by %c1_i32_35 dim 1 : vector<16x512xf32>, i32 -> vector<16x512xf32>
    %88 = arith.addf %85, %87 : vector<16x512xf32>
    %c511_i32_36 = arith.constant 511 : i32
    %89 = tpu.dynamic_rotate %86 by %c511_i32_36 dim 1 : vector<16x512xf32>, i32 -> vector<16x512xf32>
    %90 = arith.addf %88, %89 : vector<16x512xf32>
    %91 = vector.broadcast %83 : vector<16x1xf32> to vector<16x512xf32>
    %92 = arith.addf %90, %91 : vector<16x512xf32>
    %c5 = arith.constant 5 : index
    %c0_37 = arith.constant 0 : index
    %c0_38 = arith.constant 0 : index
    %93 = vector.load %arg5[%c5, %c0_37, %c0_38] : memref<8x16x1xf32, #tpu.memory_space<vmem>>, vector<1x16x1xf32>
    %94 = vector.shape_cast %93 : vector<1x16x1xf32> to vector<16x1xf32>
    %95 = vector.extract_strided_slice %81 {offsets = [48, 0], sizes = [16, 512], strides = [1, 1]} : vector<144x512xf32> to vector<16x512xf32>
    %96 = vector.extract_strided_slice %81 {offsets = [64, 0], sizes = [16, 512], strides = [1, 1]} : vector<144x512xf32> to vector<16x512xf32>
    %97 = vector.extract_strided_slice %81 {offsets = [80, 0], sizes = [16, 512], strides = [1, 1]} : vector<144x512xf32> to vector<16x512xf32>
    %c2_i32_39 = arith.constant 2 : i32
    %98 = tpu.dynamic_rotate %95 by %c2_i32_39 dim 1 : vector<16x512xf32>, i32 -> vector<16x512xf32>
    %99 = arith.addf %96, %98 : vector<16x512xf32>
    %c510_i32_40 = arith.constant 510 : i32
    %100 = tpu.dynamic_rotate %97 by %c510_i32_40 dim 1 : vector<16x512xf32>, i32 -> vector<16x512xf32>
    %101 = arith.addf %99, %100 : vector<16x512xf32>
    %102 = vector.broadcast %94 : vector<16x1xf32> to vector<16x512xf32>
    %103 = arith.addf %101, %102 : vector<16x512xf32>
    %c6 = arith.constant 6 : index
    %c0_41 = arith.constant 0 : index
    %c0_42 = arith.constant 0 : index
    %104 = vector.load %arg5[%c6, %c0_41, %c0_42] : memref<8x16x1xf32, #tpu.memory_space<vmem>>, vector<1x16x1xf32>
    %105 = vector.shape_cast %104 : vector<1x16x1xf32> to vector<16x1xf32>
    %106 = vector.extract_strided_slice %81 {offsets = [96, 0], sizes = [16, 512], strides = [1, 1]} : vector<144x512xf32> to vector<16x512xf32>
    %107 = vector.extract_strided_slice %81 {offsets = [112, 0], sizes = [16, 512], strides = [1, 1]} : vector<144x512xf32> to vector<16x512xf32>
    %108 = vector.extract_strided_slice %81 {offsets = [128, 0], sizes = [16, 512], strides = [1, 1]} : vector<144x512xf32> to vector<16x512xf32>
    %c2_i32_43 = arith.constant 2 : i32
    %109 = tpu.dynamic_rotate %106 by %c2_i32_43 dim 1 : vector<16x512xf32>, i32 -> vector<16x512xf32>
    %110 = arith.addf %107, %109 : vector<16x512xf32>
    %c510_i32_44 = arith.constant 510 : i32
    %111 = tpu.dynamic_rotate %108 by %c510_i32_44 dim 1 : vector<16x512xf32>, i32 -> vector<16x512xf32>
    %112 = arith.addf %110, %111 : vector<16x512xf32>
    %113 = vector.broadcast %105 : vector<16x1xf32> to vector<16x512xf32>
    %114 = arith.addf %112, %113 : vector<16x512xf32>
    %c0_45 = arith.constant 0 : index
    %c0_46 = arith.constant 0 : index
    %115 = vector.load %arg4[%c0_45, %c0_46] : memref<48x16xbf16, #tpu.memory_space<vmem>>, vector<48x16xbf16>
    %cst_47 = arith.constant 0.000000e+00 : f32
    %116 = vector.broadcast %cst_47 : f32 to vector<16x512xf32>
    %117 = arith.select %20, %114, %116 : vector<16x512xi1>, vector<16x512xf32>
    %118 = arith.truncf %117 : vector<16x512xf32> to vector<16x512xbf16>
    %cst_48 = arith.constant dense<0.000000e+00> : vector<48x512xf32>
    %119 = tpu.matmul %115, %118, %cst_48 {dimension_numbers = #tpu.dot_dimension_numbers<[1], [0], [0], [1], [0, 0, 1, 1], [], []>} : vector<48x16xbf16>, vector<16x512xbf16>, vector<48x512xf32> -> vector<48x512xf32>
    %c7 = arith.constant 7 : index
    %c0_49 = arith.constant 0 : index
    %c0_50 = arith.constant 0 : index
    %120 = vector.load %arg5[%c7, %c0_49, %c0_50] : memref<8x16x1xf32, #tpu.memory_space<vmem>>, vector<1x16x1xf32>
    %121 = vector.shape_cast %120 : vector<1x16x1xf32> to vector<16x1xf32>
    %122 = vector.extract_strided_slice %119 {offsets = [0, 0], sizes = [16, 512], strides = [1, 1]} : vector<48x512xf32> to vector<16x512xf32>
    %123 = vector.extract_strided_slice %119 {offsets = [16, 0], sizes = [16, 512], strides = [1, 1]} : vector<48x512xf32> to vector<16x512xf32>
    %124 = vector.extract_strided_slice %119 {offsets = [32, 0], sizes = [16, 512], strides = [1, 1]} : vector<48x512xf32> to vector<16x512xf32>
    %c2_i32_51 = arith.constant 2 : i32
    %125 = tpu.dynamic_rotate %122 by %c2_i32_51 dim 1 : vector<16x512xf32>, i32 -> vector<16x512xf32>
    %126 = arith.addf %123, %125 : vector<16x512xf32>
    %c510_i32_52 = arith.constant 510 : i32
    %127 = tpu.dynamic_rotate %124 by %c510_i32_52 dim 1 : vector<16x512xf32>, i32 -> vector<16x512xf32>
    %128 = arith.addf %126, %127 : vector<16x512xf32>
    %129 = vector.broadcast %121 : vector<16x1xf32> to vector<16x512xf32>
    %130 = arith.addf %128, %129 : vector<16x512xf32>
    %131 = vector.extract_strided_slice %33 {offsets = [0, 0], sizes = [8, 512], strides = [1, 1]} : vector<16x512xf32> to vector<8x512xf32>
    %cst_53 = arith.constant 0.000000e+00 : f32
    %132 = vector.broadcast %cst_53 : f32 to vector<8x512xf32>
    %133 = arith.maximumf %131, %132 : vector<8x512xf32>
    %c0_54 = arith.constant 0 : index
    %c0_55 = arith.constant 0 : index
    %c0_56 = arith.constant 0 : index
    %134 = vector.load %arg6[%c0_54, %c0_55, %c0_56] : memref<1x32x512xf32, #tpu.memory_space<vmem>>, vector<1x8x512xf32>
    %135 = vector.shape_cast %134 : vector<1x8x512xf32> to vector<8x512xf32>
    %136 = vector.shape_cast %133 : vector<8x512xf32> to vector<1x8x512xf32>
    tpu.vector_store %arg6[%c0_54, %c0_55, %c0_56], %136 {strides = array<i32>} : memref<1x32x512xf32, #tpu.memory_space<vmem>>, vector<1x8x512xf32>,
    %137 = vector.extract_strided_slice %92 {offsets = [0, 0], sizes = [8, 512], strides = [1, 1]} : vector<16x512xf32> to vector<8x512xf32>
    %cst_57 = arith.constant 0.000000e+00 : f32
    %138 = vector.broadcast %cst_57 : f32 to vector<8x512xf32>
    %139 = arith.maximumf %137, %138 : vector<8x512xf32>
    %c0_58 = arith.constant 0 : index
    %c8 = arith.constant 8 : index
    %c0_59 = arith.constant 0 : index
    %140 = vector.load %arg6[%c0_58, %c8, %c0_59] : memref<1x32x512xf32, #tpu.memory_space<vmem>>, vector<1x8x512xf32>
    %141 = vector.shape_cast %140 : vector<1x8x512xf32> to vector<8x512xf32>
    %142 = vector.shape_cast %139 : vector<8x512xf32> to vector<1x8x512xf32>
    tpu.vector_store %arg6[%c0_58, %c8, %c0_59], %142 {strides = array<i32>} : memref<1x32x512xf32, #tpu.memory_space<vmem>>, vector<1x8x512xf32>,
    %143 = vector.extract_strided_slice %103 {offsets = [0, 0], sizes = [8, 512], strides = [1, 1]} : vector<16x512xf32> to vector<8x512xf32>
    %cst_60 = arith.constant 0.000000e+00 : f32
    %144 = vector.broadcast %cst_60 : f32 to vector<8x512xf32>
    %145 = arith.maximumf %143, %144 : vector<8x512xf32>
    %c0_61 = arith.constant 0 : index
    %c16_62 = arith.constant 16 : index
    %c0_63 = arith.constant 0 : index
    %146 = vector.load %arg6[%c0_61, %c16_62, %c0_63] : memref<1x32x512xf32, #tpu.memory_space<vmem>>, vector<1x8x512xf32>
    %147 = vector.shape_cast %146 : vector<1x8x512xf32> to vector<8x512xf32>
    %148 = vector.shape_cast %145 : vector<8x512xf32> to vector<1x8x512xf32>
    tpu.vector_store %arg6[%c0_61, %c16_62, %c0_63], %148 {strides = array<i32>} : memref<1x32x512xf32, #tpu.memory_space<vmem>>, vector<1x8x512xf32>,
    %149 = vector.extract_strided_slice %130 {offsets = [0, 0], sizes = [8, 512], strides = [1, 1]} : vector<16x512xf32> to vector<8x512xf32>
    %cst_64 = arith.constant 0.000000e+00 : f32
    %150 = vector.broadcast %cst_64 : f32 to vector<8x512xf32>
    %151 = arith.maximumf %149, %150 : vector<8x512xf32>
    %c0_65 = arith.constant 0 : index
    %c24 = arith.constant 24 : index
    %c0_66 = arith.constant 0 : index
    %152 = vector.load %arg6[%c0_65, %c24, %c0_66] : memref<1x32x512xf32, #tpu.memory_space<vmem>>, vector<1x8x512xf32>
    %153 = vector.shape_cast %152 : vector<1x8x512xf32> to vector<8x512xf32>
    %154 = vector.shape_cast %151 : vector<8x512xf32> to vector<1x8x512xf32>
    tpu.vector_store %arg6[%c0_65, %c24, %c0_66], %154 {strides = array<i32>} : memref<1x32x512xf32, #tpu.memory_space<vmem>>, vector<1x8x512xf32>,
    return
  }
  func.func @transform_0(%arg0: i32) -> (i32, i32, i32) {
    %c0_i32 = arith.constant 0 : i32
    %c0_i32_0 = arith.constant 0 : i32
    %c0_i32_1 = arith.constant 0 : i32
    return %arg0, %c0_i32, %c0_i32_0 : i32, i32, i32
  }
  func.func @transform_1(%arg0: i32) -> (i32, i32) {
    %c0_i32 = arith.constant 0 : i32
    %c0_i32_0 = arith.constant 0 : i32
    %c0_i32_1 = arith.constant 0 : i32
    return %c0_i32, %c0_i32_0 : i32, i32
  }
  func.func @transform_2(%arg0: i32) -> (i32, i32) {
    %c0_i32 = arith.constant 0 : i32
    %c0_i32_0 = arith.constant 0 : i32
    %c0_i32_1 = arith.constant 0 : i32
    return %c0_i32, %c0_i32_0 : i32, i32
  }
  func.func @transform_3(%arg0: i32) -> (i32, i32) {
    %c0_i32 = arith.constant 0 : i32
    %c0_i32_0 = arith.constant 0 : i32
    %c0_i32_1 = arith.constant 0 : i32
    return %c0_i32, %c0_i32_0 : i32, i32
  }
  func.func @transform_4(%arg0: i32) -> (i32, i32, i32) {
    %c0_i32 = arith.constant 0 : i32
    %c0_i32_0 = arith.constant 0 : i32
    %c0_i32_1 = arith.constant 0 : i32
    %c0_i32_2 = arith.constant 0 : i32
    return %c0_i32, %c0_i32_0, %c0_i32_1 : i32, i32, i32
  }
  func.func @transform_5(%arg0: i32) -> (i32, i32, i32) {
    %c0_i32 = arith.constant 0 : i32
    %c0_i32_0 = arith.constant 0 : i32
    %c0_i32_1 = arith.constant 0 : i32
    return %arg0, %c0_i32, %c0_i32_0 : i32, i32, i32
  }
}

</mosaic_0001>

<llo_original>
// kernel: tpu_custom_call.1
$region0: #{tpu_custom_call.1}
  #allocation0 [shape = 'u32[]', space=smem, size = 0x4, offset = 0x4, fixed_abs, tag = 'smem constant byte address 0x4 - core index']
  #allocation1 [shape = 'u32[144,128]{1,0:T(1,128)}', space=vmem, size = 0x12000, scoped, tag = 'internal scratch']
  #allocation2 [shape = 'bf16[48,512]{1,0:T(16,128)(2,1)}', space=vmem, size = 0xc000, scoped, tag = 'scratch operand']
  %s0 = inlined_call_operand.vmem [shape: bf16[2,16,512], index: 0, kind: input, shape index: {}]
  %s1 = inlined_call_operand.vmem [shape: bf16[192,16], index: 1, kind: input, shape index: {}]
  %s2 = inlined_call_operand.vmem [shape: bf16[144,48], index: 2, kind: input, shape index: {}]
  %s3 = inlined_call_operand.vmem [shape: bf16[48,16], index: 3, kind: input, shape index: {}]
  %s4 = inlined_call_operand.vmem [shape: f32[8,16,1], index: 4, kind: input, shape index: {}]
  %s5 = inlined_call_operand.hbm [shape: f32[2,32,512], index: 5, kind: output, shape index: {}]
  %s6 = sld [smem:[#allocation0]]
  $region53: #{tpu_custom_call.1} parent=0
    _
  %s8 = ssub.s32 1, %s6
  %s9 = scalar_select 0, %s8, %s6
  $region1: #{tpu_custom_call.1} parent=0
    #allocation3 [shape = 'u8[131072]{0}', space=vmem, size = 0x20000, scoped, tag = 'output window, operand 0']
    #allocation4 [shape = 's32[2]{0}', space=sflag, size = 0x8, scoped, tag = 'scoped memory for tpu_custom_call.1']
    %10 = vsyncpa [#allocation4], 0
    %s11 = scalar_lea.sflag [#allocation4], 1
    %12 = vsyncpa %s11, 0
    loop: start=0, step=1, limit=4
    $region2: #{tpu_custom_call.1} parent=1 // loop_pre_header
      _
    $region3: #{tpu_custom_call.1} parent=1 // loop_header
      %s14 = sphi 0, %s18
      %p15 = scmp.ge.s32.totalorder %s14, 4
      %s24 = sphi 0, %s26
      %s27 = sphi 0, %s24
      %s28 = sphi 0, %s27
      %s44 = sphi 0, %s28
      %s48 = sphi 0, %s48
      %s50 = sphi 0, %s48
      %s51 = sphi 0, %s50
      %s65 = sphi 0, %s51
      %s69 = sphi 0, %s69
      %s71 = sphi 0, %s69
      %s72 = sphi 0, %s71
      %s86 = sphi 0, %s72
      %s90 = sphi 0, %s90
      %s92 = sphi 0, %s90
      %s93 = sphi 0, %s92
      %s107 = sphi 0, %s93
      %s111 = sphi 0, %s111
      %s113 = sphi 0, %s111
      %s114 = sphi 0, %s113
      %s128 = sphi 0, %s114
      %s134 = sphi 0, %s136
      %s137 = sphi 0, %s134
      %s138 = sphi 0, %s137
      %s154 = sphi 0, %s138
    $region4: #{tpu_custom_call.1} parent=1 // loop_header_branch
      %17 = sbr.rel (%p15) target = $region8
    $region5: #{tpu_custom_call.1} parent=1 // loop_body
      %s19 = ssub.s32 %s14, 1
      %s20 = ssub.s32 %s14, 2
      %s21 = sadd.s32 %s14, 1
      %s22 = ssub.s32 %s14, %s21
      %p23 = scmp.eq.s32.totalorder %s22, 0
      %s25 = sadd.s32 %s24, 1
      %s26 = scalar_select %p23, %s24, %s25
      %p29 = pneg %p23
      %p30 = scmp.eq.s32.totalorder %s14, 1
      %p31 = por %p29, %p30
      %p32 = scmp.ne.s32.totalorder %s24, %s27
      %p33 = scmp.eq.s32.totalorder %s14, 0
      %p34 = por %p32, %p33
      %p35 = scmp.ne.s32.totalorder %s24, %s27
      %p36 = scmp.eq.s32.totalorder %s19, 1
      %p37 = por %p35, %p36
      %p38 = scmp.ne.s32.totalorder %s27, %s28
      %p39 = scmp.eq.s32.totalorder %s19, 0
      %p40 = por %p38, %p39
      %p41 = scmp.ne.s32.totalorder %s27, %s28
      %p42 = scmp.eq.s32.totalorder %s20, 1
      %p43 = por %p41, %p42
      %p45 = scmp.ne.s32.totalorder %s28, %s44
      %p46 = scmp.eq.s32.totalorder %s20, 0
      %p47 = por %p45, %p46
      %s49 = sadd.s32 %s48, 1
      %p52 = scmp.eq.s32.totalorder %s14, 1
      %p53 = scmp.ne.s32.totalorder %s48, %s50
      %p54 = scmp.eq.s32.totalorder %s14, 0
      %p55 = por %p53, %p54
      %p56 = scmp.ne.s32.totalorder %s48, %s50
      %p57 = scmp.eq.s32.totalorder %s19, 1
      %p58 = por %p56, %p57
      %p59 = scmp.ne.s32.totalorder %s50, %s51
      %p60 = scmp.eq.s32.totalorder %s19, 0
      %p61 = por %p59, %p60
      %p62 = scmp.ne.s32.totalorder %s50, %s51
      %p63 = scmp.eq.s32.totalorder %s20, 1
      %p64 = por %p62, %p63
      %p66 = scmp.ne.s32.totalorder %s51, %s65
      %p67 = scmp.eq.s32.totalorder %s20, 0
      %p68 = por %p66, %p67
      %s70 = sadd.s32 %s69, 1
      %p73 = scmp.eq.s32.totalorder %s14, 1
      %p74 = scmp.ne.s32.totalorder %s69, %s71
      %p75 = scmp.eq.s32.totalorder %s14, 0
      %p76 = por %p74, %p75
      %p77 = scmp.ne.s32.totalorder %s69, %s71
      %p78 = scmp.eq.s32.totalorder %s19, 1
      %p79 = por %p77, %p78
      %p80 = scmp.ne.s32.totalorder %s71, %s72
      %p81 = scmp.eq.s32.totalorder %s19, 0
      %p82 = por %p80, %p81
      %p83 = scmp.ne.s32.totalorder %s71, %s72
      %p84 = scmp.eq.s32.totalorder %s20, 1
      %p85 = por %p83, %p84
      %p87 = scmp.ne.s32.totalorder %s72, %s86
      %p88 = scmp.eq.s32.totalorder %s20, 0
      %p89 = por %p87, %p88
      %s91 = sadd.s32 %s90, 1
      %p94 = scmp.eq.s32.totalorder %s14, 1
      %p95 = scmp.ne.s32.totalorder %s90, %s92
      %p96 = scmp.eq.s32.totalorder %s14, 0
      %p97 = por %p95, %p96
      %p98 = scmp.ne.s32.totalorder %s90, %s92
      %p99 = scmp.eq.s32.totalorder %s19, 1
      %p100 = por %p98, %p99
      %p101 = scmp.ne.s32.totalorder %s92, %s93
      %p102 = scmp.eq.s32.totalorder %s19, 0
      %p103 = por %p101, %p102
      %p104 = scmp.ne.s32.totalorder %s92, %s93
      %p105 = scmp.eq.s32.totalorder %s20, 1
      %p106 = por %p104, %p105
      %p108 = scmp.ne.s32.totalorder %s93, %s107
      %p109 = scmp.eq.s32.totalorder %s20, 0
      %p110 = por %p108, %p109
      %s112 = sadd.s32 %s111, 1
      %p115 = scmp.eq.s32.totalorder %s14, 1
      %p116 = scmp.ne.s32.totalorder %s111, %s113
      %p117 = scmp.eq.s32.totalorder %s14, 0
      %p118 = por %p116, %p117
      %p119 = scmp.ne.s32.totalorder %s111, %s113
      %p120 = scmp.eq.s32.totalorder %s19, 1
      %p121 = por %p119, %p120
      %p122 = scmp.ne.s32.totalorder %s113, %s114
      %p123 = scmp.eq.s32.totalorder %s19, 0
      %p124 = por %p122, %p123
      %p125 = scmp.ne.s32.totalorder %s113, %s114
      %p126 = scmp.eq.s32.totalorder %s20, 1
      %p127 = por %p125, %p126
      %p129 = scmp.ne.s32.totalorder %s114, %s128
      %p130 = scmp.eq.s32.totalorder %s20, 0
      %p131 = por %p129, %p130
      %s132 = ssub.s32 %s14, %s21
      %p133 = scmp.eq.s32.totalorder %s132, 0
      %s135 = sadd.s32 %s134, 1
      %s136 = scalar_select %p133, %s134, %s135
      %p139 = pneg %p133
      %p140 = scmp.eq.s32.totalorder %s14, 1
      %p141 = por %p139, %p140
      %p142 = scmp.ne.s32.totalorder %s134, %s137
      %p143 = scmp.eq.s32.totalorder %s14, 0
      %p144 = por %p142, %p143
      %p145 = scmp.ne.s32.totalorder %s134, %s137
      %p146 = scmp.eq.s32.totalorder %s19, 1
      %p147 = por %p145, %p146
      %p148 = scmp.ne.s32.totalorder %s137, %s138
      %p149 = scmp.eq.s32.totalorder %s19, 0
      %p150 = por %p148, %p149
      %p151 = scmp.ne.s32.totalorder %s137, %s138
      %p152 = scmp.eq.s32.totalorder %s20, 1
      %p153 = por %p151, %p152
      %p155 = scmp.ne.s32.totalorder %s138, %s154
      %p156 = scmp.eq.s32.totalorder %s20, 0
      %p157 = por %p155, %p156
      %p158 = scmp.le.s32.totalorder 1, %s14
      %p159 = scmp.lt.s32.totalorder %s14, 3
      %p160 = pnand %p158, %p159
      %p161 = pneg %p160
      // Predicated region
      $region9: #{tpu_custom_call.1} parent=5 // pred_check
        _
      $region10: #{tpu_custom_call.1} parent=5 // pred_check_branch
        %163 = sbr.rel (%p160) target = $region12
      $region11: #{tpu_custom_call.1} parent=5 // pred_region
        %s164 = ssub.s32 %s14, 1
        // Predicated region
        $region13: #{tpu_custom_call.1} parent=11 // pred_check
          %p165 = pneg %p61
        $region14: #{tpu_custom_call.1} parent=11 // pred_check_branch
          %167 = sbr.rel (%p165) target = $region16
        $region15: #{tpu_custom_call.1} parent=11 // pred_region
          _
        $region16: #{tpu_custom_call.1} parent=11 // pred_fallthru
          _
        // Predicated region
        $region17: #{tpu_custom_call.1} parent=11 // pred_check
          %p168 = pneg %p82
        $region18: #{tpu_custom_call.1} parent=11 // pred_check_branch
          %170 = sbr.rel (%p168) target = $region20
        $region19: #{tpu_custom_call.1} parent=11 // pred_region
          _
        $region20: #{tpu_custom_call.1} parent=11 // pred_fallthru
          _
        // Predicated region
        $region21: #{tpu_custom_call.1} parent=11 // pred_check
          %p171 = pneg %p103
        $region22: #{tpu_custom_call.1} parent=11 // pred_check_branch
          %173 = sbr.rel (%p171) target = $region24
        $region23: #{tpu_custom_call.1} parent=11 // pred_region
          _
        $region24: #{tpu_custom_call.1} parent=11 // pred_fallthru
          _
        // Predicated region
        $region25: #{tpu_custom_call.1} parent=11 // pred_check
          %p174 = pneg %p124
        $region26: #{tpu_custom_call.1} parent=11 // pred_check_branch
          %176 = sbr.rel (%p174) target = $region28
        $region27: #{tpu_custom_call.1} parent=11 // pred_region
          _
        $region28: #{tpu_custom_call.1} parent=11 // pred_fallthru
          _
      $region12: #{tpu_custom_call.1} parent=5 // pred_fallthru
        _
      %p177 = scmp.lt.s32.totalorder %s14, 2
      // Predicated region
      $region29: #{tpu_custom_call.1} parent=5 // pred_check
        %p178 = pneg %p177
      $region30: #{tpu_custom_call.1} parent=5 // pred_check_branch
        %180 = sbr.rel (%p178) target = $region32
      $region31: #{tpu_custom_call.1} parent=5 // pred_region
        // Predicated region
        $region33: #{tpu_custom_call.1} parent=31 // pred_check
          %p181 = pneg %p34
        $region34: #{tpu_custom_call.1} parent=31 // pred_check_branch
          %183 = sbr.rel (%p181) target = $region36
        $region35: #{tpu_custom_call.1} parent=31 // pred_region
          %p184 = scmp.lt.s32.totalorder %s14, 1
          %s185 = scalar_select %p184, %s14, 1
          %s186 = smul.addr %s185, 8
          %s187 = smul.addr %s186, 4
          %s188 = scalar_lea.vmem %s0, %s187
        $region36: #{tpu_custom_call.1} parent=31 // pred_fallthru
          _
      $region32: #{tpu_custom_call.1} parent=5 // pred_fallthru
        _
      %p189 = scmp.le.s32.totalorder 1, %s14
      %p190 = scmp.lt.s32.totalorder %s14, 3
      %p191 = pnand %p189, %p190
      %p192 = pneg %p191
      // Predicated region
      $region37: #{tpu_custom_call.1} parent=5 // pred_check
        _
      $region38: #{tpu_custom_call.1} parent=5 // pred_check_branch
        %194 = sbr.rel (%p191) target = $region40
      $region39: #{tpu_custom_call.1} parent=5 // pred_region
        %s195 = ssub.s32 %s14, 1
        %p196 = scmp.lt.s32.totalorder %s19, 1
        %s197 = scalar_select %p196, %s19, 1
        %s198 = smul.addr %s197, 8
        %s199 = smul.addr %s198, 4
        %s200 = scalar_lea.vmem %s0, %s199
        %p201 = pneg %p40
        %p202 = pneg %p37
        %p203 = pneg %p61
        %p204 = pneg %p58
        %p205 = pneg %p82
        %p206 = pneg %p79
        %p207 = pneg %p103
        %p208 = pneg %p100
        %p209 = pneg %p124
        %p210 = pneg %p121
        %p211 = pneg %p150
        %p212 = pneg %p147
        %s213 = sand.u32 %s137, 1
        %s214 = scalar_lea.sflag [#allocation4], %s213
        %s215 = sand.u32 %s137, 1
        %s216 = smul.addr %s215, 128
        %s217 = scalar_lea.vmem [#allocation3], %s216
        %p218 = scmp.lt.s32.totalorder %s19, 1
        %s219 = scalar_select %p218, %s19, 1
        %s220 = smul.addr %s219, 8
        %s221 = smul.addr %s220, 4
        %s222 = scalar_lea.vmem %s0, %s221
        %v224 = vld [vmem:[%s222] sm:$0xff]
        %v225 = vld [vmem:[%s222 + $0x8] sm:$0xff]
        %v226 = vld [vmem:[%s222 + $0x10] sm:$0xff]
        %v227 = vld [vmem:[%s222 + $0x18] sm:$0xff]
        %v228 = vlaneseq
        %v229 = vand.u32 %v228, 127
        %v230 = vadd.s32 %v229, 128
        %v231 = vadd.s32 %v229, 256
        %v232 = vadd.s32 %v229, 384
        %vm233 = vcmp.lt.s32.totalorder %v229, 0
        %v234 = vsub.s32 0, %v229
        %v235 = vsel %vm233, %v234, %v229
        %v236 = vshrl.u32 %v235, 7
        %v237 = vand.u32 %v235, 127
        %v238 = vsub.s32 0, %v237
        %v239 = vsel %vm233, %v238, %v237
        %vm240 = vcmp.lt.s32.totalorder %v230, 0
        %v241 = vsub.s32 0, %v230
        %v242 = vsel %vm240, %v241, %v230
        %v243 = vshrl.u32 %v242, 7
        %v244 = vand.u32 %v242, 127
        %v245 = vsub.s32 0, %v244
        %v246 = vsel %vm240, %v245, %v244
        %vm247 = vcmp.lt.s32.totalorder %v231, 0
        %v248 = vsub.s32 0, %v231
        %v249 = vsel %vm247, %v248, %v231
        %v250 = vshrl.u32 %v249, 7
        %v251 = vand.u32 %v249, 127
        %v252 = vsub.s32 0, %v251
        %v253 = vsel %vm247, %v252, %v251
        %vm254 = vcmp.lt.s32.totalorder %v232, 0
        %v255 = vsub.s32 0, %v232
        %v256 = vsel %vm254, %v255, %v232
        %v257 = vshrl.u32 %v256, 7
        %v258 = vand.u32 %v256, 127
        %v259 = vsub.s32 0, %v258
        %v260 = vsel %vm254, %v259, %v258
        %vm261 = vcmp.ne.s32.totalorder %v239, 0
        %vm262 = vcmp.ne.s32.totalorder %v246, 0
        %vm263 = vcmp.ne.s32.totalorder %v253, 0
        %vm264 = vcmp.ne.s32.totalorder %v260, 0
        %vm265 = vcmp.lt.s32.totalorder %v239, 0
        %vm266 = vcmp.lt.s32.totalorder %v246, 0
        %vm267 = vcmp.lt.s32.totalorder %v253, 0
        %vm268 = vcmp.lt.s32.totalorder %v260, 0
        %vm269 = vmand %vm265, %vm261
        %vm270 = vmand %vm266, %vm262
        %vm271 = vmand %vm267, %vm263
        %vm272 = vmand %vm268, %vm264
        %v273 = vadd.s32 %v239, 128
        %v274 = vadd.s32 %v246, 128
        %v275 = vadd.s32 %v253, 128
        %v276 = vadd.s32 %v260, 128
        %v277 = vsel %vm269, %v273, %v239
        %v278 = vsel %vm270, %v274, %v246
        %v279 = vsel %vm271, %v275, %v253
        %v280 = vsel %vm272, %v276, %v260
        %vm281 = vcmp.lt.s32.totalorder %v277, 16
        %vm282 = vcmp.lt.s32.totalorder %v278, 16
        %vm283 = vcmp.lt.s32.totalorder %v279, 16
        %vm284 = vcmp.lt.s32.totalorder %v280, 16
        %v285 = vld [vmem:[%s1] sm:$0xf]
        %v286 = vld [vmem:[%s1 + $0x4] sm:$0xf]
        %v287 = vld [vmem:[%s1 + $0x8] sm:$0xf]
        %v288 = vld [vmem:[%s1 + $0xc] sm:$0xf]
        %v289 = vld [vmem:[%s1 + $0x10] sm:$0xf]
        %v290 = vld [vmem:[%s1 + $0x14] sm:$0xf]
        %v291 = vld [vmem:[%s1 + $0x18] sm:$0xf]
        %v292 = vld [vmem:[%s1 + $0x1c] sm:$0xf]
        %v293 = vld [vmem:[%s1 + $0x20] sm:$0xf]
        %v294 = vld [vmem:[%s1 + $0x24] sm:$0xf]
        %v295 = vld [vmem:[%s1 + $0x28] sm:$0xf]
        %v296 = vld [vmem:[%s1 + $0x2c] sm:$0xf]
        %v297 = vld [vmem:[%s1 + $0x30] sm:$0xf]
        %v298 = vld [vmem:[%s1 + $0x34] sm:$0xf]
        %v299 = vld [vmem:[%s1 + $0x38] sm:$0xf]
        %v300 = vld [vmem:[%s1 + $0x3c] sm:$0xf]
        %v301 = vld [vmem:[%s1 + $0x40] sm:$0xf]
        %v302 = vld [vmem:[%s1 + $0x44] sm:$0xf]
        %v303 = vld [vmem:[%s1 + $0x48] sm:$0xf]
        %v304 = vld [vmem:[%s1 + $0x4c] sm:$0xf]
        %v305 = vld [vmem:[%s1 + $0x50] sm:$0xf]
        %v306 = vld [vmem:[%s1 + $0x54] sm:$0xf]
        %v307 = vld [vmem:[%s1 + $0x58] sm:$0xf]
        %v308 = vld [vmem:[%s1 + $0x5c] sm:$0xf]
        %v333 = vunpack.c.l.b16 %v285
        %v334 = vunpack.c.l.b16 %v286
        %v335 = vunpack.c.l.b16 %v287
        %v336 = vunpack.c.l.b16 %v288
        %v337 = vunpack.c.l.b16 %v289
        %v338 = vunpack.c.l.b16 %v290
        %v339 = vunpack.c.l.b16 %v291
        %v340 = vunpack.c.l.b16 %v292
        %v341 = vunpack.c.l.b16 %v293
        %v342 = vunpack.c.l.b16 %v294
        %v343 = vunpack.c.l.b16 %v295
        %v344 = vunpack.c.l.b16 %v296
        %v345 = vunpack.c.l.b16 %v297
        %v346 = vunpack.c.l.b16 %v298
        %v347 = vunpack.c.l.b16 %v299
        %v348 = vunpack.c.l.b16 %v300
        %v349 = vunpack.c.l.b16 %v301
        %v350 = vunpack.c.l.b16 %v302
        %v351 = vunpack.c.l.b16 %v303
        %v352 = vunpack.c.l.b16 %v304
        %v353 = vunpack.c.l.b16 %v305
        %v354 = vunpack.c.l.b16 %v306
        %v355 = vunpack.c.l.b16 %v307
        %v356 = vunpack.c.l.b16 %v308
        %v357 = vpack.c.b16 %v334, %v333
        %v358 = vpack.c.b16 %v336, %v335
        %v359 = vpack.c.b16 %v338, %v337
        %v360 = vpack.c.b16 %v340, %v339
        %v361 = vpack.c.b16 %v342, %v341
        %v362 = vpack.c.b16 %v344, %v343
        %v363 = vpack.c.b16 %v346, %v345
        %v364 = vpack.c.b16 %v348, %v347
        %v365 = vpack.c.b16 %v350, %v349
        %v366 = vpack.c.b16 %v352, %v351
        %v367 = vpack.c.b16 %v354, %v353
        %v368 = vpack.c.b16 %v356, %v355
        %v373 = vunpack.c.l.b16 %v224
        %v374 = vunpack.c.h.b16 %v224
        %v375 = vunpack.c.l.b16 %v225
        %v376 = vunpack.c.h.b16 %v225
        %v377 = vunpack.c.l.b16 %v226
        %v378 = vunpack.c.h.b16 %v226
        %v379 = vunpack.c.l.b16 %v227
        %v380 = vunpack.c.h.b16 %v227
        %v381 = vpack.c.b16 %v377, %v373
        %v382 = vpack.c.b16 %v378, %v374
        %v383 = vpack.c.b16 %v379, %v375
        %v384 = vpack.c.b16 %v380, %v376
        %vm389 = vcmask 130048
        %v391 = vsel %vm389, %v357, 0
        %v394 = vsel %vm389, %v358, 0
        %v397 = vsel %vm389, %v359, 0
        %v400 = vsel %vm389, %v360, 0
        %v403 = vsel %vm389, %v361, 0
        %v406 = vsel %vm389, %v362, 0
        %v409 = vsel %vm389, %v363, 0
        %v412 = vsel %vm389, %v364, 0
        %v415 = vsel %vm389, %v365, 0
        %v418 = vsel %vm389, %v366, 0
        %v421 = vsel %vm389, %v367, 0
        %v424 = vsel %vm389, %v368, 0
        %426 = vmatprep.subr.bf16.mxu0 %v382
        %427 = vmatpush1.bf16.msra.mxu0 %v381
        %428 = vmatprep.subr.bf16.mxu0 0
        %429 = vmatpush1.bf16.msra.mxu0 0
        %430 = vmatprep.subr.bf16.mxu0 0
        %431 = vmatpush1.bf16.msra.mxu0 0
        %432 = vmatprep.subr.bf16.mxu0 0
        %433 = vmatpush1.bf16.msra.mxu0 0
        %434 = vmatprep.subr.bf16.mxu0 0
        %435 = vmatpush1.bf16.msra.mxu0 0
        %436 = vmatprep.subr.bf16.mxu0 0
        %437 = vmatpush1.bf16.msra.mxu0 0
        %438 = vmatprep.subr.bf16.mxu0 0
        %439 = vmatpush1.bf16.msra.mxu0 0
        %440 = vmatprep.subr.bf16.mxu0 0
        %441 = vmatpush1.bf16.msra.mxu0 0
        %442 = vmatprep.subr.bf16.mxu0 0
        %443 = vmatpush1.bf16.msra.mxu0 0
        %444 = vmatprep.subr.bf16.mxu0 0
        %445 = vmatpush1.bf16.msra.mxu0 0
        %446 = vmatprep.subr.bf16.mxu0 0
        %447 = vmatpush1.bf16.msra.mxu0 0
        %448 = vmatprep.subr.bf16.mxu0 0
        %449 = vmatpush1.bf16.msra.mxu0 0
        %450 = vmatprep.subr.bf16.mxu0 0
        %451 = vmatpush1.bf16.msra.mxu0 0
        %452 = vmatprep.subr.bf16.mxu0 0
        %453 = vmatpush1.bf16.msra.mxu0 0
        %454 = vmatprep.subr.bf16.mxu0 0
        %455 = vmatpush1.bf16.msra.mxu0 0
        %456 = vmatprep.subr.bf16.mxu0 0
        %457 = vmatpush1.bf16.msra.mxu0 0
        %458 = vmatprep.mubr.bf16.mxu0 0
        %459 = vmatmul.mubr.bf16.gmra.mrb[0].mxu0 %v391
        %v460 = vpop.f32.mrb[0].mxu0
        %v461 = vadd.f32 0.0, %v460
        %v462 = vpop.f32.mrb[0].mxu0
        %v463 = vadd.f32 0.0, %v462
        %v464 = vpop.f32.mrb[0].mxu0
        %v465 = vpop.f32.mrb[0].mxu0
        %466 = vmatprep.mubr.bf16.mxu0 0
        %467 = vmatmul.mubr.bf16.gmra.mrb[0].mxu0 %v394
        %v468 = vpop.f32.mrb[0].mxu0
        %v469 = vadd.f32 0.0, %v468
        %v470 = vpop.f32.mrb[0].mxu0
        %v471 = vadd.f32 0.0, %v470
        %v472 = vpop.f32.mrb[0].mxu0
        %v473 = vpop.f32.mrb[0].mxu0
        %474 = vmatprep.mubr.bf16.mxu0 0
        %475 = vmatmul.mubr.bf16.gmra.mrb[0].mxu0 %v397
        %v476 = vpop.f32.mrb[0].mxu0
        %v477 = vadd.f32 0.0, %v476
        %v478 = vpop.f32.mrb[0].mxu0
        %v479 = vadd.f32 0.0, %v478
        %v480 = vpop.f32.mrb[0].mxu0
        %v481 = vpop.f32.mrb[0].mxu0
        %482 = vmatprep.mubr.bf16.mxu0 0
        %483 = vmatmul.mubr.bf16.gmra.mrb[0].mxu0 %v400
        %v484 = vpop.f32.mrb[0].mxu0
        %v485 = vadd.f32 0.0, %v484
        %v486 = vpop.f32.mrb[0].mxu0
        %v487 = vadd.f32 0.0, %v486
        %v488 = vpop.f32.mrb[0].mxu0
        %v489 = vadd.f32 0.0, %v488
        %v490 = vpop.f32.mrb[0].mxu0
        %v491 = vadd.f32 0.0, %v490
        %492 = vmatprep.mubr.bf16.mxu0 0
        %493 = vmatmul.mubr.bf16.gmra.mrb[0].mxu0 %v403
        %v494 = vpop.f32.mrb[0].mxu0
        %v495 = vadd.f32 0.0, %v494
        %v496 = vpop.f32.mrb[0].mxu0
        %v497 = vadd.f32 0.0, %v496
        %v498 = vpop.f32.mrb[0].mxu0
        %v499 = vadd.f32 0.0, %v498
        %v500 = vpop.f32.mrb[0].mxu0
        %v501 = vadd.f32 0.0, %v500
        %502 = vmatprep.mubr.bf16.mxu0 0
        %503 = vmatmul.mubr.bf16.gmra.mrb[0].mxu0 %v406
        %v504 = vpop.f32.mrb[0].mxu0
        %v505 = vadd.f32 0.0, %v504
        %v506 = vpop.f32.mrb[0].mxu0
        %v507 = vadd.f32 0.0, %v506
        %v508 = vpop.f32.mrb[0].mxu0
        %v509 = vadd.f32 0.0, %v508
        %v510 = vpop.f32.mrb[0].mxu0
        %v511 = vadd.f32 0.0, %v510
        %512 = vmatprep.mubr.bf16.mxu0 0
        %513 = vmatmul.mubr.bf16.gmra.mrb[0].mxu0 %v409
        %v514 = vpop.f32.mrb[0].mxu0
        %v515 = vadd.f32 0.0, %v514
        %v516 = vpop.f32.mrb[0].mxu0
        %v517 = vadd.f32 0.0, %v516
        %v518 = vpop.f32.mrb[0].mxu0
        %v519 = vadd.f32 0.0, %v518
        %v520 = vpop.f32.mrb[0].mxu0
        %v521 = vadd.f32 0.0, %v520
        %522 = vmatprep.mubr.bf16.mxu0 0
        %523 = vmatmul.mubr.bf16.gmra.mrb[0].mxu0 %v412
        %v524 = vpop.f32.mrb[0].mxu0
        %v525 = vadd.f32 0.0, %v524
        %v526 = vpop.f32.mrb[0].mxu0
        %v527 = vadd.f32 0.0, %v526
        %v528 = vpop.f32.mrb[0].mxu0
        %v529 = vadd.f32 0.0, %v528
        %v530 = vpop.f32.mrb[0].mxu0
        %v531 = vadd.f32 0.0, %v530
        %532 = vmatprep.mubr.bf16.mxu0 0
        %533 = vmatmul.mubr.bf16.gmra.mrb[0].mxu0 %v415
        %v534 = vpop.f32.mrb[0].mxu0
        %v535 = vadd.f32 0.0, %v534
        %v536 = vpop.f32.mrb[0].mxu0
        %v537 = vadd.f32 0.0, %v536
        %v538 = vpop.f32.mrb[0].mxu0
        %v539 = vadd.f32 0.0, %v538
        %v540 = vpop.f32.mrb[0].mxu0
        %v541 = vadd.f32 0.0, %v540
        %542 = vmatprep.mubr.bf16.mxu0 0
        %543 = vmatmul.mubr.bf16.gmra.mrb[0].mxu0 %v418
        %v544 = vpop.f32.mrb[0].mxu0
        %v545 = vadd.f32 0.0, %v544
        %v546 = vpop.f32.mrb[0].mxu0
        %v547 = vadd.f32 0.0, %v546
        %v548 = vpop.f32.mrb[0].mxu0
        %v549 = vadd.f32 0.0, %v548
        %v550 = vpop.f32.mrb[0].mxu0
        %v551 = vadd.f32 0.0, %v550
        %552 = vmatprep.mubr.bf16.mxu0 0
        %553 = vmatmul.mubr.bf16.gmra.mrb[0].mxu0 %v421
        %v554 = vpop.f32.mrb[0].mxu0
        %v555 = vadd.f32 0.0, %v554
        %v556 = vpop.f32.mrb[0].mxu0
        %v557 = vadd.f32 0.0, %v556
        %v558 = vpop.f32.mrb[0].mxu0
        %v559 = vadd.f32 0.0, %v558
        %v560 = vpop.f32.mrb[0].mxu0
        %v561 = vadd.f32 0.0, %v560
        %562 = vmatprep.mubr.bf16.mxu0 0
        %563 = vmatmul.mubr.bf16.gmra.mrb[0].mxu0 %v424
        %v564 = vpop.f32.mrb[0].mxu0
        %v565 = vadd.f32 0.0, %v564
        %v566 = vpop.f32.mrb[0].mxu0
        %v567 = vadd.f32 0.0, %v566
        %v568 = vpop.f32.mrb[0].mxu0
        %v569 = vadd.f32 0.0, %v568
        %v570 = vpop.f32.mrb[0].mxu0
        %v571 = vadd.f32 0.0, %v570
        %572 = vdwg.mxu0
        %573 = vmatprep.subr.bf16.mxu0 %v384
        %574 = vmatpush1.bf16.msra.mxu0 %v383
        %575 = vmatprep.subr.bf16.mxu0 0
        %576 = vmatpush1.bf16.msra.mxu0 0
        %577 = vmatprep.subr.bf16.mxu0 0
        %578 = vmatpush1.bf16.msra.mxu0 0
        %579 = vmatprep.subr.bf16.mxu0 0
        %580 = vmatpush1.bf16.msra.mxu0 0
        %581 = vmatprep.subr.bf16.mxu0 0
        %582 = vmatpush1.bf16.msra.mxu0 0
        %583 = vmatprep.subr.bf16.mxu0 0
        %584 = vmatpush1.bf16.msra.mxu0 0
        %585 = vmatprep.subr.bf16.mxu0 0
        %586 = vmatpush1.bf16.msra.mxu0 0
        %587 = vmatprep.subr.bf16.mxu0 0
        %588 = vmatpush1.bf16.msra.mxu0 0
        %589 = vmatprep.subr.bf16.mxu0 0
        %590 = vmatpush1.bf16.msra.mxu0 0
        %591 = vmatprep.subr.bf16.mxu0 0
        %592 = vmatpush1.bf16.msra.mxu0 0
        %593 = vmatprep.subr.bf16.mxu0 0
        %594 = vmatpush1.bf16.msra.mxu0 0
        %595 = vmatprep.subr.bf16.mxu0 0
        %596 = vmatpush1.bf16.msra.mxu0 0
        %597 = vmatprep.subr.bf16.mxu0 0
        %598 = vmatpush1.bf16.msra.mxu0 0
        %599 = vmatprep.subr.bf16.mxu0 0
        %600 = vmatpush1.bf16.msra.mxu0 0
        %601 = vmatprep.subr.bf16.mxu0 0
        %602 = vmatpush1.bf16.msra.mxu0 0
        %603 = vmatprep.subr.bf16.mxu0 0
        %604 = vmatpush1.bf16.msra.mxu0 0
        %605 = vmatprep.mubr.bf16.mxu0 0
        %606 = vmatmul.mubr.bf16.gmra.mrb[0].mxu0 %v391
        %v607 = vpop.f32.mrb[0].mxu0
        %v608 = vadd.f32 0.0, %v607
        %v609 = vpop.f32.mrb[0].mxu0
        %v610 = vadd.f32 0.0, %v609
        %v611 = vpop.f32.mrb[0].mxu0
        %v612 = vpop.f32.mrb[0].mxu0
        %613 = vmatprep.mubr.bf16.mxu0 0
        %614 = vmatmul.mubr.bf16.gmra.mrb[0].mxu0 %v394
        %v615 = vpop.f32.mrb[0].mxu0
        %v616 = vadd.f32 0.0, %v615
        %v617 = vpop.f32.mrb[0].mxu0
        %v618 = vadd.f32 0.0, %v617
        %v619 = vpop.f32.mrb[0].mxu0
        %v620 = vpop.f32.mrb[0].mxu0
        %621 = vmatprep.mubr.bf16.mxu0 0
        %622 = vmatmul.mubr.bf16.gmra.mrb[0].mxu0 %v397
        %v623 = vpop.f32.mrb[0].mxu0
        %v624 = vadd.f32 0.0, %v623
        %v625 = vpop.f32.mrb[0].mxu0
        %v626 = vadd.f32 0.0, %v625
        %v627 = vpop.f32.mrb[0].mxu0
        %v628 = vpop.f32.mrb[0].mxu0
        %629 = vmatprep.mubr.bf16.mxu0 0
        %630 = vmatmul.mubr.bf16.gmra.mrb[0].mxu0 %v400
        %v631 = vpop.f32.mrb[0].mxu0
        %v632 = vadd.f32 0.0, %v631
        %v633 = vpop.f32.mrb[0].mxu0
        %v634 = vadd.f32 0.0, %v633
        %v635 = vpop.f32.mrb[0].mxu0
        %v636 = vadd.f32 0.0, %v635
        %v637 = vpop.f32.mrb[0].mxu0
        %v638 = vadd.f32 0.0, %v637
        %639 = vmatprep.mubr.bf16.mxu0 0
        %640 = vmatmul.mubr.bf16.gmra.mrb[0].mxu0 %v403
        %v641 = vpop.f32.mrb[0].mxu0
        %v642 = vadd.f32 0.0, %v641
        %v643 = vpop.f32.mrb[0].mxu0
        %v644 = vadd.f32 0.0, %v643
        %v645 = vpop.f32.mrb[0].mxu0
        %v646 = vadd.f32 0.0, %v645
        %v647 = vpop.f32.mrb[0].mxu0
        %v648 = vadd.f32 0.0, %v647
        %649 = vmatprep.mubr.bf16.mxu0 0
        %650 = vmatmul.mubr.bf16.gmra.mrb[0].mxu0 %v406
        %v651 = vpop.f32.mrb[0].mxu0
        %v652 = vadd.f32 0.0, %v651
        %v653 = vpop.f32.mrb[0].mxu0
        %v654 = vadd.f32 0.0, %v653
        %v655 = vpop.f32.mrb[0].mxu0
        %v656 = vadd.f32 0.0, %v655
        %v657 = vpop.f32.mrb[0].mxu0
        %v658 = vadd.f32 0.0, %v657
        %659 = vmatprep.mubr.bf16.mxu0 0
        %660 = vmatmul.mubr.bf16.gmra.mrb[0].mxu0 %v409
        %v661 = vpop.f32.mrb[0].mxu0
        %v662 = vadd.f32 0.0, %v661
        %v663 = vpop.f32.mrb[0].mxu0
        %v664 = vadd.f32 0.0, %v663
        %v665 = vpop.f32.mrb[0].mxu0
        %v666 = vadd.f32 0.0, %v665
        %v667 = vpop.f32.mrb[0].mxu0
        %v668 = vadd.f32 0.0, %v667
        %669 = vmatprep.mubr.bf16.mxu0 0
        %670 = vmatmul.mubr.bf16.gmra.mrb[0].mxu0 %v412
        %v671 = vpop.f32.mrb[0].mxu0
        %v672 = vadd.f32 0.0, %v671
        %v673 = vpop.f32.mrb[0].mxu0
        %v674 = vadd.f32 0.0, %v673
        %v675 = vpop.f32.mrb[0].mxu0
        %v676 = vadd.f32 0.0, %v675
        %v677 = vpop.f32.mrb[0].mxu0
        %v678 = vadd.f32 0.0, %v677
        %679 = vmatprep.mubr.bf16.mxu0 0
        %680 = vmatmul.mubr.bf16.gmra.mrb[0].mxu0 %v415
        %v681 = vpop.f32.mrb[0].mxu0
        %v682 = vadd.f32 0.0, %v681
        %v683 = vpop.f32.mrb[0].mxu0
        %v684 = vadd.f32 0.0, %v683
        %v685 = vpop.f32.mrb[0].mxu0
        %v686 = vadd.f32 0.0, %v685
        %v687 = vpop.f32.mrb[0].mxu0
        %v688 = vadd.f32 0.0, %v687
        %689 = vmatprep.mubr.bf16.mxu0 0
        %690 = vmatmul.mubr.bf16.gmra.mrb[0].mxu0 %v418
        %v691 = vpop.f32.mrb[0].mxu0
        %v692 = vadd.f32 0.0, %v691
        %v693 = vpop.f32.mrb[0].mxu0
        %v694 = vadd.f32 0.0, %v693
        %v695 = vpop.f32.mrb[0].mxu0
        %v696 = vadd.f32 0.0, %v695
        %v697 = vpop.f32.mrb[0].mxu0
        %v698 = vadd.f32 0.0, %v697
        %699 = vmatprep.mubr.bf16.mxu0 0
        %700 = vmatmul.mubr.bf16.gmra.mrb[0].mxu0 %v421
        %v701 = vpop.f32.mrb[0].mxu0
        %v702 = vadd.f32 0.0, %v701
        %v703 = vpop.f32.mrb[0].mxu0
        %v704 = vadd.f32 0.0, %v703
        %v705 = vpop.f32.mrb[0].mxu0
        %v706 = vadd.f32 0.0, %v705
        %v707 = vpop.f32.mrb[0].mxu0
        %v708 = vadd.f32 0.0, %v707
        %709 = vmatprep.mubr.bf16.mxu0 0
        %710 = vmatmul.mubr.bf16.gmra.mrb[0].mxu0 %v424
        %v711 = vpop.f32.mrb[0].mxu0
        %v712 = vadd.f32 0.0, %v711
        %v713 = vpop.f32.mrb[0].mxu0
        %v714 = vadd.f32 0.0, %v713
        %v715 = vpop.f32.mrb[0].mxu0
        %v716 = vadd.f32 0.0, %v715
        %v717 = vpop.f32.mrb[0].mxu0
        %v718 = vadd.f32 0.0, %v717
        %719 = vdwg.mxu0
        %v720 = vld [vmem:[%s4] sm:$0xff]
        %721 = vrot.lane.b32.xlu0 %v461, 1
        %v722 = vpop.permute.xlu0 %721
        %723 = vrot.lane.b32.xlu0 %v463, 1
        %v724 = vpop.permute.xlu0 %723
        %725 = vrot.lane.b32.xlu0 %v608, 1
        %v726 = vpop.permute.xlu0 %725
        %727 = vrot.lane.b32.xlu0 %v610, 1
        %v728 = vpop.permute.xlu0 %727
        %vm729 = vcmp.lt.s32.totalorder %v229, 1
        %v730 = vsel %vm729, %v726, %v728
        %v731 = vsel %vm729, %v724, %v726
        %v732 = vsel %vm729, %v722, %v724
        %v733 = vsel %vm729, %v728, %v722
        %v734 = vadd.f32 %v469, %v733
        %v735 = vadd.f32 %v471, %v732
        %v736 = vadd.f32 %v616, %v731
        %v737 = vadd.f32 %v618, %v730
        %738 = vrot.lane.b32.xlu0 %v477, 127
        %v739 = vpop.permute.xlu0 %738
        %740 = vrot.lane.b32.xlu0 %v479, 127
        %v741 = vpop.permute.xlu0 %740
        %742 = vrot.lane.b32.xlu0 %v624, 127
        %v743 = vpop.permute.xlu0 %742
        %744 = vrot.lane.b32.xlu0 %v626, 127
        %v745 = vpop.permute.xlu0 %744
        %vm746 = vcmp.lt.s32.totalorder %v229, 127
        %v747 = vsel %vm746, %v743, %v745
        %v748 = vsel %vm746, %v741, %v743
        %v749 = vsel %vm746, %v739, %v741
        %v750 = vsel %vm746, %v745, %v739
        %v751 = vadd.f32 %v734, %v749
        %v752 = vadd.f32 %v735, %v748
        %v753 = vadd.f32 %v736, %v747
        %v754 = vadd.f32 %v737, %v750
        %756 = vset.pattern.permute.xlu0 0
        %757 = vperm.xlu0 %756, %v720
        %v758 = vpop.permute.xlu0 %757
        %v760 = vadd.f32 %v751, %v758
        %v761 = vadd.f32 %v752, %v758
        %v762 = vadd.f32 %v753, %v758
        %v763 = vadd.f32 %v754, %v758
        %s764 = scalar_lea.vmem %s4, 16
        %v765 = vld [vmem:[%s764] sm:$0xff]
        %v766 = vld [vmem:[%s764 + $0x8] sm:$0xff]
        %767 = vrot.lane.b32.xlu0 %v485, 1
        %v768 = vpop.permute.xlu0 %767
        %769 = vrot.lane.b32.xlu0 %v489, 1
        %v770 = vpop.permute.xlu0 %769
        %771 = vrot.lane.b32.xlu0 %v487, 1
        %v772 = vpop.permute.xlu0 %771
        %773 = vrot.lane.b32.xlu0 %v491, 1
        %v774 = vpop.permute.xlu0 %773
        %775 = vrot.lane.b32.xlu0 %v632, 1
        %v776 = vpop.permute.xlu0 %775
        %777 = vrot.lane.b32.xlu0 %v636, 1
        %v778 = vpop.permute.xlu0 %777
        %779 = vrot.lane.b32.xlu0 %v634, 1
        %v780 = vpop.permute.xlu0 %779
        %781 = vrot.lane.b32.xlu0 %v638, 1
        %v782 = vpop.permute.xlu0 %781
        %v783 = vsel %vm729, %v776, %v780
        %v784 = vsel %vm729, %v778, %v782
        %v785 = vsel %vm729, %v772, %v776
        %v786 = vsel %vm729, %v774, %v778
        %v787 = vsel %vm729, %v768, %v772
        %v788 = vsel %vm729, %v770, %v774
        %v789 = vsel %vm729, %v780, %v768
        %v790 = vsel %vm729, %v782, %v770
        %v791 = vadd.f32 %v495, %v789
        %v792 = vadd.f32 %v497, %v787
        %v793 = vadd.f32 %v642, %v785
        %v794 = vadd.f32 %v644, %v783
        %v795 = vadd.f32 %v499, %v790
        %v796 = vadd.f32 %v501, %v788
        %v797 = vadd.f32 %v646, %v786
        %v798 = vadd.f32 %v648, %v784
        %799 = vrot.lane.b32.xlu0 %v505, 127
        %v800 = vpop.permute.xlu0 %799
        %801 = vrot.lane.b32.xlu0 %v509, 127
        %v802 = vpop.permute.xlu0 %801
        %803 = vrot.lane.b32.xlu0 %v507, 127
        %v804 = vpop.permute.xlu0 %803
        %805 = vrot.lane.b32.xlu0 %v511, 127
        %v806 = vpop.permute.xlu0 %805
        %807 = vrot.lane.b32.xlu0 %v652, 127
        %v808 = vpop.permute.xlu0 %807
        %809 = vrot.lane.b32.xlu0 %v656, 127
        %v810 = vpop.permute.xlu0 %809
        %811 = vrot.lane.b32.xlu0 %v654, 127
        %v812 = vpop.permute.xlu0 %811
        %813 = vrot.lane.b32.xlu0 %v658, 127
        %v814 = vpop.permute.xlu0 %813
        %v815 = vsel %vm746, %v808, %v812
        %v816 = vsel %vm746, %v810, %v814
        %v817 = vsel %vm746, %v804, %v808
        %v818 = vsel %vm746, %v806, %v810
        %v819 = vsel %vm746, %v800, %v804
        %v820 = vsel %vm746, %v802, %v806
        %v821 = vsel %vm746, %v812, %v800
        %v822 = vsel %vm746, %v814, %v802
        %v823 = vadd.f32 %v791, %v819
        %v824 = vadd.f32 %v792, %v817
        %v825 = vadd.f32 %v793, %v815
        %v826 = vadd.f32 %v794, %v821
        %v827 = vadd.f32 %v795, %v820
        %v828 = vadd.f32 %v796, %v818
        %v829 = vadd.f32 %v797, %v816
        %v830 = vadd.f32 %v798, %v822
        %832 = vset.pattern.permute.xlu0 0
        %833 = vperm.xlu0 %832, %v765
        %v834 = vpop.permute.xlu0 %833
        %837 = vset.pattern.permute.xlu0 0
        %838 = vperm.xlu0 %837, %v766
        %v839 = vpop.permute.xlu0 %838
        %v841 = vadd.f32 %v823, %v834
        %v842 = vadd.f32 %v824, %v834
        %v843 = vadd.f32 %v825, %v834
        %v844 = vadd.f32 %v826, %v834
        %v845 = vadd.f32 %v827, %v839
        %v846 = vadd.f32 %v828, %v839
        %v847 = vadd.f32 %v829, %v839
        %v848 = vadd.f32 %v830, %v839
        %s849 = scalar_lea.vmem %s4, 32
        %v850 = vld [vmem:[%s849] sm:$0xff]
        %v851 = vld [vmem:[%s849 + $0x8] sm:$0xff]
        %852 = vrot.lane.b32.xlu0 %v515, 2
        %v853 = vpop.permute.xlu0 %852
        %854 = vrot.lane.b32.xlu0 %v519, 2
        %v855 = vpop.permute.xlu0 %854
        %856 = vrot.lane.b32.xlu0 %v517, 2
        %v857 = vpop.permute.xlu0 %856
        %858 = vrot.lane.b32.xlu0 %v521, 2
        %v859 = vpop.permute.xlu0 %858
        %860 = vrot.lane.b32.xlu0 %v662, 2
        %v861 = vpop.permute.xlu0 %860
        %862 = vrot.lane.b32.xlu0 %v666, 2
        %v863 = vpop.permute.xlu0 %862
        %864 = vrot.lane.b32.xlu0 %v664, 2
        %v865 = vpop.permute.xlu0 %864
        %866 = vrot.lane.b32.xlu0 %v668, 2
        %v867 = vpop.permute.xlu0 %866
        %vm868 = vcmp.lt.s32.totalorder %v229, 2
        %v869 = vsel %vm868, %v861, %v865
        %v870 = vsel %vm868, %v863, %v867
        %v871 = vsel %vm868, %v857, %v861
        %v872 = vsel %vm868, %v859, %v863
        %v873 = vsel %vm868, %v853, %v857
        %v874 = vsel %vm868, %v855, %v859
        %v875 = vsel %vm868, %v865, %v853
        %v876 = vsel %vm868, %v867, %v855
        %v877 = vadd.f32 %v525, %v875
        %v878 = vadd.f32 %v527, %v873
        %v879 = vadd.f32 %v672, %v871
        %v880 = vadd.f32 %v674, %v869
        %v881 = vadd.f32 %v529, %v876
        %v882 = vadd.f32 %v531, %v874
        %v883 = vadd.f32 %v676, %v872
        %v884 = vadd.f32 %v678, %v870
        %885 = vrot.lane.b32.xlu0 %v535, 126
        %v886 = vpop.permute.xlu0 %885
        %887 = vrot.lane.b32.xlu0 %v539, 126
        %v888 = vpop.permute.xlu0 %887
        %889 = vrot.lane.b32.xlu0 %v537, 126
        %v890 = vpop.permute.xlu0 %889
        %891 = vrot.lane.b32.xlu0 %v541, 126
        %v892 = vpop.permute.xlu0 %891
        %893 = vrot.lane.b32.xlu0 %v682, 126
        %v894 = vpop.permute.xlu0 %893
        %895 = vrot.lane.b32.xlu0 %v686, 126
        %v896 = vpop.permute.xlu0 %895
        %897 = vrot.lane.b32.xlu0 %v684, 126
        %v898 = vpop.permute.xlu0 %897
        %899 = vrot.lane.b32.xlu0 %v688, 126
        %v900 = vpop.permute.xlu0 %899
        %vm901 = vcmp.lt.s32.totalorder %v229, 126
        %v902 = vsel %vm901, %v894, %v898
        %v903 = vsel %vm901, %v896, %v900
        %v904 = vsel %vm901, %v890, %v894
        %v905 = vsel %vm901, %v892, %v896
        %v906 = vsel %vm901, %v886, %v890
        %v907 = vsel %vm901, %v888, %v892
        %v908 = vsel %vm901, %v898, %v886
        %v909 = vsel %vm901, %v900, %v888
        %v910 = vadd.f32 %v877, %v906
        %v911 = vadd.f32 %v878, %v904
        %v912 = vadd.f32 %v879, %v902
        %v913 = vadd.f32 %v880, %v908
        %v914 = vadd.f32 %v881, %v907
        %v915 = vadd.f32 %v882, %v905
        %v916 = vadd.f32 %v883, %v903
        %v917 = vadd.f32 %v884, %v909
        %919 = vset.pattern.permute.xlu0 0
        %920 = vperm.xlu0 %919, %v850
        %v921 = vpop.permute.xlu0 %920
        %924 = vset.pattern.permute.xlu0 0
        %925 = vperm.xlu0 %924, %v851
        %v926 = vpop.permute.xlu0 %925
        %v928 = vadd.f32 %v910, %v921
        %v929 = vadd.f32 %v911, %v921
        %v930 = vadd.f32 %v912, %v921
        %v931 = vadd.f32 %v913, %v921
        %v932 = vadd.f32 %v914, %v926
        %v933 = vadd.f32 %v915, %v926
        %v934 = vadd.f32 %v916, %v926
        %v935 = vadd.f32 %v917, %v926
        %s936 = scalar_lea.vmem %s4, 48
        %v937 = vld [vmem:[%s936] sm:$0xff]
        %v938 = vld [vmem:[%s936 + $0x8] sm:$0xff]
        %939 = vrot.lane.b32.xlu0 %v545, 1
        %v940 = vpop.permute.xlu0 %939
        %941 = vrot.lane.b32.xlu0 %v549, 1
        %v942 = vpop.permute.xlu0 %941
        %943 = vrot.lane.b32.xlu0 %v547, 1
        %v944 = vpop.permute.xlu0 %943
        %945 = vrot.lane.b32.xlu0 %v551, 1
        %v946 = vpop.permute.xlu0 %945
        %947 = vrot.lane.b32.xlu0 %v692, 1
        %v948 = vpop.permute.xlu0 %947
        %949 = vrot.lane.b32.xlu0 %v696, 1
        %v950 = vpop.permute.xlu0 %949
        %951 = vrot.lane.b32.xlu0 %v694, 1
        %v952 = vpop.permute.xlu0 %951
        %953 = vrot.lane.b32.xlu0 %v698, 1
        %v954 = vpop.permute.xlu0 %953
        %v955 = vsel %vm729, %v948, %v952
        %v956 = vsel %vm729, %v950, %v954
        %v957 = vsel %vm729, %v944, %v948
        %v958 = vsel %vm729, %v946, %v950
        %v959 = vsel %vm729, %v940, %v944
        %v960 = vsel %vm729, %v942, %v946
        %v961 = vsel %vm729, %v952, %v940
        %v962 = vsel %vm729, %v954, %v942
        %v963 = vadd.f32 %v555, %v961
        %v964 = vadd.f32 %v557, %v959
        %v965 = vadd.f32 %v702, %v957
        %v966 = vadd.f32 %v704, %v955
        %v967 = vadd.f32 %v559, %v962
        %v968 = vadd.f32 %v561, %v960
        %v969 = vadd.f32 %v706, %v958
        %v970 = vadd.f32 %v708, %v956
        %971 = vrot.lane.b32.xlu0 %v565, 127
        %v972 = vpop.permute.xlu0 %971
        %973 = vrot.lane.b32.xlu0 %v569, 127
        %v974 = vpop.permute.xlu0 %973
        %975 = vrot.lane.b32.xlu0 %v567, 127
        %v976 = vpop.permute.xlu0 %975
        %977 = vrot.lane.b32.xlu0 %v571, 127
        %v978 = vpop.permute.xlu0 %977
        %979 = vrot.lane.b32.xlu0 %v712, 127
        %v980 = vpop.permute.xlu0 %979
        %981 = vrot.lane.b32.xlu0 %v716, 127
        %v982 = vpop.permute.xlu0 %981
        %983 = vrot.lane.b32.xlu0 %v714, 127
        %v984 = vpop.permute.xlu0 %983
        %985 = vrot.lane.b32.xlu0 %v718, 127
        %v986 = vpop.permute.xlu0 %985
        %v987 = vsel %vm746, %v980, %v984
        %v988 = vsel %vm746, %v982, %v986
        %v989 = vsel %vm746, %v976, %v980
        %v990 = vsel %vm746, %v978, %v982
        %v991 = vsel %vm746, %v972, %v976
        %v992 = vsel %vm746, %v974, %v978
        %v993 = vsel %vm746, %v984, %v972
        %v994 = vsel %vm746, %v986, %v974
        %v995 = vadd.f32 %v963, %v991
        %v996 = vadd.f32 %v964, %v989
        %v997 = vadd.f32 %v965, %v987
        %v998 = vadd.f32 %v966, %v993
        %v999 = vadd.f32 %v967, %v992
        %v1000 = vadd.f32 %v968, %v990
        %v1001 = vadd.f32 %v969, %v988
        %v1002 = vadd.f32 %v970, %v994
        %1004 = vset.pattern.permute.xlu0 0
        %1005 = vperm.xlu0 %1004, %v937
        %v1006 = vpop.permute.xlu0 %1005
        %1009 = vset.pattern.permute.xlu0 0
        %1010 = vperm.xlu0 %1009, %v938
        %v1011 = vpop.permute.xlu0 %1010
        %v1013 = vadd.f32 %v995, %v1006
        %v1014 = vadd.f32 %v996, %v1006
        %v1015 = vadd.f32 %v997, %v1006
        %v1016 = vadd.f32 %v998, %v1006
        %v1017 = vadd.f32 %v999, %v1011
        %v1018 = vadd.f32 %v1000, %v1011
        %v1019 = vadd.f32 %v1001, %v1011
        %v1020 = vadd.f32 %v1002, %v1011
        %v1021 = vsel %vm281, %v841, 0.0
        %v1022 = vsel %vm282, %v842, 0.0
        %v1023 = vsel %vm283, %v843, 0.0
        %v1024 = vsel %vm284, %v844, 0.0
        %v1025 = vsel %vm281, %v845, 0.0
        %v1026 = vsel %vm282, %v846, 0.0
        %v1027 = vsel %vm283, %v847, 0.0
        %v1028 = vsel %vm284, %v848, 0.0
        %v1029 = vpack.c.bf16 %v1025, %v1021
        %v1030 = vpack.c.bf16 %v1026, %v1022
        %v1031 = vpack.c.bf16 %v1027, %v1023
        %v1032 = vpack.c.bf16 %v1028, %v1024
        %1033 = vst [vmem:[#allocation2] sm:$0xff] %v1029
        %1034 = vst [vmem:[#allocation2 + $0x8] sm:$0xff] %v1030
        %1035 = vst [vmem:[#allocation2 + $0x10] sm:$0xff] %v1031
        %1036 = vst [vmem:[#allocation2 + $0x18] sm:$0xff] %v1032
        %v1037 = vsel %vm281, %v928, 0.0
        %v1038 = vsel %vm282, %v929, 0.0
        %v1039 = vsel %vm283, %v930, 0.0
        %v1040 = vsel %vm284, %v931, 0.0
        %v1041 = vsel %vm281, %v932, 0.0
        %v1042 = vsel %vm282, %v933, 0.0
        %v1043 = vsel %vm283, %v934, 0.0
        %v1044 = vsel %vm284, %v935, 0.0
        %v1045 = vpack.c.bf16 %v1041, %v1037
        %v1046 = vpack.c.bf16 %v1042, %v1038
        %v1047 = vpack.c.bf16 %v1043, %v1039
        %v1048 = vpack.c.bf16 %v1044, %v1040
        %1049 = vst [vmem:[#allocation2 + $0x20] sm:$0xff] %v1045
        %1050 = vst [vmem:[#allocation2 + $0x28] sm:$0xff] %v1046
        %1051 = vst [vmem:[#allocation2 + $0x30] sm:$0xff] %v1047
        %1052 = vst [vmem:[#allocation2 + $0x38] sm:$0xff] %v1048
        %v1053 = vsel %vm281, %v1013, 0.0
        %v1054 = vsel %vm282, %v1014, 0.0
        %v1055 = vsel %vm283, %v1015, 0.0
        %v1056 = vsel %vm284, %v1016, 0.0
        %v1057 = vsel %vm281, %v1017, 0.0
        %v1058 = vsel %vm282, %v1018, 0.0
        %v1059 = vsel %vm283, %v1019, 0.0
        %v1060 = vsel %vm284, %v1020, 0.0
        %v1061 = vpack.c.bf16 %v1057, %v1053
        %v1062 = vpack.c.bf16 %v1058, %v1054
        %v1063 = vpack.c.bf16 %v1059, %v1055
        %v1064 = vpack.c.bf16 %v1060, %v1056
        %1065 = vst [vmem:[#allocation2 + $0x40] sm:$0xff] %v1061
        %1066 = vst [vmem:[#allocation2 + $0x48] sm:$0xff] %v1062
        %1067 = vst [vmem:[#allocation2 + $0x50] sm:$0xff] %v1063
        %1068 = vst [vmem:[#allocation2 + $0x58] sm:$0xff] %v1064
        %v1069 = vld [vmem:[%s2] sm:$0xf]
        %v1070 = vld [vmem:[%s2 + $0x4] sm:$0xf]
        %v1071 = vld [vmem:[%s2 + $0x8] sm:$0xf]
        %v1072 = vld [vmem:[%s2 + $0xc] sm:$0xf]
        %v1073 = vld [vmem:[%s2 + $0x10] sm:$0xf]
        %v1074 = vld [vmem:[%s2 + $0x14] sm:$0xf]
        %v1075 = vld [vmem:[%s2 + $0x18] sm:$0xf]
        %v1076 = vld [vmem:[%s2 + $0x1c] sm:$0xf]
        %v1077 = vld [vmem:[%s2 + $0x20] sm:$0xf]
        %v1078 = vld [vmem:[%s2 + $0x24] sm:$0xf]
        %v1079 = vld [vmem:[%s2 + $0x28] sm:$0xf]
        %v1080 = vld [vmem:[%s2 + $0x2c] sm:$0xf]
        %v1081 = vld [vmem:[%s2 + $0x30] sm:$0xf]
        %v1082 = vld [vmem:[%s2 + $0x34] sm:$0xf]
        %v1083 = vld [vmem:[%s2 + $0x38] sm:$0xf]
        %v1084 = vld [vmem:[%s2 + $0x3c] sm:$0xf]
        %v1085 = vld [vmem:[%s2 + $0x40] sm:$0xf]
        %v1086 = vld [vmem:[%s2 + $0x44] sm:$0xf]
        %v1087 = vld [vmem:[#allocation2] sm:$0xff]
        %v1088 = vld [vmem:[#allocation2 + $0x8] sm:$0xff]
        %v1089 = vld [vmem:[#allocation2 + $0x10] sm:$0xff]
        %v1090 = vld [vmem:[#allocation2 + $0x18] sm:$0xff]
        %v1091 = vld [vmem:[#allocation2 + $0x20] sm:$0xff]
        %v1092 = vld [vmem:[#allocation2 + $0x28] sm:$0xff]
        %v1093 = vld [vmem:[#allocation2 + $0x30] sm:$0xff]
        %v1094 = vld [vmem:[#allocation2 + $0x38] sm:$0xff]
        %v1095 = vld [vmem:[#allocation2 + $0x40] sm:$0xff]
        %v1096 = vld [vmem:[#allocation2 + $0x48] sm:$0xff]
        %v1097 = vld [vmem:[#allocation2 + $0x50] sm:$0xff]
        %v1098 = vld [vmem:[#allocation2 + $0x58] sm:$0xff]
        %v1117 = vunpack.c.l.b16 %v1069
        %v1118 = vunpack.c.l.b16 %v1070
        %v1119 = vunpack.c.l.b16 %v1071
        %v1120 = vunpack.c.l.b16 %v1072
        %v1121 = vunpack.c.l.b16 %v1073
        %v1122 = vunpack.c.l.b16 %v1074
        %v1123 = vunpack.c.l.b16 %v1075
        %v1124 = vunpack.c.l.b16 %v1076
        %v1125 = vunpack.c.l.b16 %v1077
        %v1126 = vunpack.c.l.b16 %v1078
        %v1127 = vunpack.c.l.b16 %v1079
        %v1128 = vunpack.c.l.b16 %v1080
        %v1129 = vunpack.c.l.b16 %v1081
        %v1130 = vunpack.c.l.b16 %v1082
        %v1131 = vunpack.c.l.b16 %v1083
        %v1132 = vunpack.c.l.b16 %v1084
        %v1133 = vunpack.c.l.b16 %v1085
        %v1134 = vunpack.c.l.b16 %v1086
        %v1135 = vpack.c.b16 %v1118, %v1117
        %v1136 = vpack.c.b16 %v1120, %v1119
        %v1137 = vpack.c.b16 %v1122, %v1121
        %v1138 = vpack.c.b16 %v1124, %v1123
        %v1139 = vpack.c.b16 %v1126, %v1125
        %v1140 = vpack.c.b16 %v1128, %v1127
        %v1141 = vpack.c.b16 %v1130, %v1129
        %v1142 = vpack.c.b16 %v1132, %v1131
        %v1143 = vpack.c.b16 %v1134, %v1133
        %vm1144 = vcmask 392192
        %v1146 = vsel %vm1144, %v1135, 0
        %v1149 = vsel %vm1144, %v1136, 0
        %v1152 = vsel %vm1144, %v1137, 0
        %v1155 = vsel %vm1144, %v1138, 0
        %v1158 = vsel %vm1144, %v1139, 0
        %v1161 = vsel %vm1144, %v1140, 0
        %v1164 = vsel %vm1144, %v1141, 0
        %v1167 = vsel %vm1144, %v1142, 0
        %v1170 = vsel %vm1144, %v1143, 0
        %1172 = vmatprep.subr.bf16.mxu0 %v1088
        %1173 = vmatpush1.bf16.msra.mxu0 %v1087
        %1174 = vmatprep.subr.bf16.mxu0 %v1092
        %1175 = vmatpush1.bf16.msra.mxu0 %v1091
        %1176 = vmatprep.subr.bf16.mxu0 %v1096
        %1177 = vmatpush1.bf16.msra.mxu0 %v1095
        %1178 = vmatprep.subr.bf16.mxu0 0
        %1179 = vmatpush1.bf16.msra.mxu0 0
        %1180 = vmatprep.subr.bf16.mxu0 0
        %1181 = vmatpush1.bf16.msra.mxu0 0
        %1182 = vmatprep.subr.bf16.mxu0 0
        %1183 = vmatpush1.bf16.msra.mxu0 0
        %1184 = vmatprep.subr.bf16.mxu0 0
        %1185 = vmatpush1.bf16.msra.mxu0 0
        %1186 = vmatprep.subr.bf16.mxu0 0
        %1187 = vmatpush1.bf16.msra.mxu0 0
        %1188 = vmatprep.subr.bf16.mxu0 0
        %1189 = vmatpush1.bf16.msra.mxu0 0
        %1190 = vmatprep.subr.bf16.mxu0 0
        %1191 = vmatpush1.bf16.msra.mxu0 0
        %1192 = vmatprep.subr.bf16.mxu0 0
        %1193 = vmatpush1.bf16.msra.mxu0 0
        %1194 = vmatprep.subr.bf16.mxu0 0
        %1195 = vmatpush1.bf16.msra.mxu0 0
        %1196 = vmatprep.subr.bf16.mxu0 0
        %1197 = vmatpush1.bf16.msra.mxu0 0
        %1198 = vmatprep.subr.bf16.mxu0 0
        %1199 = vmatpush1.bf16.msra.mxu0 0
        %1200 = vmatprep.subr.bf16.mxu0 0
        %1201 = vmatpush1.bf16.msra.mxu0 0
        %1202 = vmatprep.subr.bf16.mxu0 0
        %1203 = vmatpush1.bf16.msra.mxu0 0
        %1204 = vmatprep.mubr.bf16.mxu0 0
        %1205 = vmatmul.mubr.bf16.gmra.mrb[0].mxu0 %v1146
        %v1206 = vpop.f32.mrb[0].mxu0
        %v1207 = vadd.f32 0.0, %v1206
        %v1208 = vpop.f32.mrb[0].mxu0
        %v1209 = vadd.f32 0.0, %v1208
        %v1210 = vpop.f32.mrb[0].mxu0
        %v1211 = vpop.f32.mrb[0].mxu0
        %1212 = vmatprep.mubr.bf16.mxu0 0
        %1213 = vmatmul.mubr.bf16.gmra.mrb[0].mxu0 %v1149
        %v1214 = vpop.f32.mrb[0].mxu0
        %v1215 = vadd.f32 0.0, %v1214
        %v1216 = vpop.f32.mrb[0].mxu0
        %v1217 = vadd.f32 0.0, %v1216
        %v1218 = vpop.f32.mrb[0].mxu0
        %v1219 = vpop.f32.mrb[0].mxu0
        %1220 = vmatprep.mubr.bf16.mxu0 0
        %1221 = vmatmul.mubr.bf16.gmra.mrb[0].mxu0 %v1152
        %v1222 = vpop.f32.mrb[0].mxu0
        %v1223 = vadd.f32 0.0, %v1222
        %v1224 = vpop.f32.mrb[0].mxu0
        %v1225 = vadd.f32 0.0, %v1224
        %v1226 = vpop.f32.mrb[0].mxu0
        %v1227 = vpop.f32.mrb[0].mxu0
        %1228 = vmatprep.mubr.bf16.mxu0 0
        %1229 = vmatmul.mubr.bf16.gmra.mrb[0].mxu0 %v1155
        %v1230 = vpop.f32.mrb[0].mxu0
        %v1231 = vadd.f32 0.0, %v1230
        %v1232 = vpop.f32.mrb[0].mxu0
        %v1233 = vadd.f32 0.0, %v1232
        %v1234 = vpop.f32.mrb[0].mxu0
        %v1235 = vpop.f32.mrb[0].mxu0
        %1236 = vmatprep.mubr.bf16.mxu0 0
        %1237 = vmatmul.mubr.bf16.gmra.mrb[0].mxu0 %v1158
        %v1238 = vpop.f32.mrb[0].mxu0
        %v1239 = vadd.f32 0.0, %v1238
        %v1240 = vpop.f32.mrb[0].mxu0
        %v1241 = vadd.f32 0.0, %v1240
        %v1242 = vpop.f32.mrb[0].mxu0
        %v1243 = vpop.f32.mrb[0].mxu0
        %1244 = vmatprep.mubr.bf16.mxu0 0
        %1245 = vmatmul.mubr.bf16.gmra.mrb[0].mxu0 %v1161
        %v1246 = vpop.f32.mrb[0].mxu0
        %v1247 = vadd.f32 0.0, %v1246
        %v1248 = vpop.f32.mrb[0].mxu0
        %v1249 = vadd.f32 0.0, %v1248
        %v1250 = vpop.f32.mrb[0].mxu0
        %v1251 = vpop.f32.mrb[0].mxu0
        %1252 = vmatprep.mubr.bf16.mxu0 0
        %1253 = vmatmul.mubr.bf16.gmra.mrb[0].mxu0 %v1164
        %v1254 = vpop.f32.mrb[0].mxu0
        %v1255 = vadd.f32 0.0, %v1254
        %v1256 = vpop.f32.mrb[0].mxu0
        %v1257 = vadd.f32 0.0, %v1256
        %v1258 = vpop.f32.mrb[0].mxu0
        %v1259 = vadd.f32 0.0, %v1258
        %v1260 = vpop.f32.mrb[0].mxu0
        %v1261 = vadd.f32 0.0, %v1260
        %1262 = vmatprep.mubr.bf16.mxu0 0
        %1263 = vmatmul.mubr.bf16.gmra.mrb[0].mxu0 %v1167
        %v1264 = vpop.f32.mrb[0].mxu0
        %v1265 = vadd.f32 0.0, %v1264
        %v1266 = vpop.f32.mrb[0].mxu0
        %v1267 = vadd.f32 0.0, %v1266
        %v1268 = vpop.f32.mrb[0].mxu0
        %v1269 = vadd.f32 0.0, %v1268
        %v1270 = vpop.f32.mrb[0].mxu0
        %v1271 = vadd.f32 0.0, %v1270
        %1272 = vmatprep.mubr.bf16.mxu0 0
        %1273 = vmatmul.mubr.bf16.gmra.mrb[0].mxu0 %v1170
        %v1274 = vpop.f32.mrb[0].mxu0
        %v1275 = vadd.f32 0.0, %v1274
        %v1276 = vpop.f32.mrb[0].mxu0
        %v1277 = vadd.f32 0.0, %v1276
        %v1278 = vpop.f32.mrb[0].mxu0
        %v1279 = vadd.f32 0.0, %v1278
        %v1280 = vpop.f32.mrb[0].mxu0
        %v1281 = vadd.f32 0.0, %v1280
        %1282 = vdwg.mxu0
        %1283 = vmatprep.subr.bf16.mxu0 %v1090
        %1284 = vmatpush1.bf16.msra.mxu0 %v1089
        %1285 = vmatprep.subr.bf16.mxu0 %v1094
        %1286 = vmatpush1.bf16.msra.mxu0 %v1093
        %1287 = vmatprep.subr.bf16.mxu0 %v1098
        %1288 = vmatpush1.bf16.msra.mxu0 %v1097
        %1289 = vmatprep.subr.bf16.mxu0 0
        %1290 = vmatpush1.bf16.msra.mxu0 0
        %1291 = vmatprep.subr.bf16.mxu0 0
        %1292 = vmatpush1.bf16.msra.mxu0 0
        %1293 = vmatprep.subr.bf16.mxu0 0
        %1294 = vmatpush1.bf16.msra.mxu0 0
        %1295 = vmatprep.subr.bf16.mxu0 0
        %1296 = vmatpush1.bf16.msra.mxu0 0
        %1297 = vmatprep.subr.bf16.mxu0 0
        %1298 = vmatpush1.bf16.msra.mxu0 0
        %1299 = vmatprep.subr.bf16.mxu0 0
        %1300 = vmatpush1.bf16.msra.mxu0 0
        %1301 = vmatprep.subr.bf16.mxu0 0
        %1302 = vmatpush1.bf16.msra.mxu0 0
        %1303 = vmatprep.subr.bf16.mxu0 0
        %1304 = vmatpush1.bf16.msra.mxu0 0
        %1305 = vmatprep.subr.bf16.mxu0 0
        %1306 = vmatpush1.bf16.msra.mxu0 0
        %1307 = vmatprep.subr.bf16.mxu0 0
        %1308 = vmatpush1.bf16.msra.mxu0 0
        %1309 = vmatprep.subr.bf16.mxu0 0
        %1310 = vmatpush1.bf16.msra.mxu0 0
        %1311 = vmatprep.subr.bf16.mxu0 0
        %1312 = vmatpush1.bf16.msra.mxu0 0
        %1313 = vmatprep.subr.bf16.mxu0 0
        %1314 = vmatpush1.bf16.msra.mxu0 0
        %1315 = vmatprep.mubr.bf16.mxu0 0
        %1316 = vmatmul.mubr.bf16.gmra.mrb[0].mxu0 %v1146
        %v1317 = vpop.f32.mrb[0].mxu0
        %v1318 = vadd.f32 0.0, %v1317
        %v1319 = vpop.f32.mrb[0].mxu0
        %v1320 = vadd.f32 0.0, %v1319
        %v1321 = vpop.f32.mrb[0].mxu0
        %v1322 = vpop.f32.mrb[0].mxu0
        %1323 = vmatprep.mubr.bf16.mxu0 0
        %1324 = vmatmul.mubr.bf16.gmra.mrb[0].mxu0 %v1149
        %v1325 = vpop.f32.mrb[0].mxu0
        %v1326 = vadd.f32 0.0, %v1325
        %v1327 = vpop.f32.mrb[0].mxu0
        %v1328 = vadd.f32 0.0, %v1327
        %v1329 = vpop.f32.mrb[0].mxu0
        %v1330 = vpop.f32.mrb[0].mxu0
        %1331 = vmatprep.mubr.bf16.mxu0 0
        %1332 = vmatmul.mubr.bf16.gmra.mrb[0].mxu0 %v1152
        %v1333 = vpop.f32.mrb[0].mxu0
        %v1334 = vadd.f32 0.0, %v1333
        %v1335 = vpop.f32.mrb[0].mxu0
        %v1336 = vadd.f32 0.0, %v1335
        %v1337 = vpop.f32.mrb[0].mxu0
        %v1338 = vpop.f32.mrb[0].mxu0
        %1339 = vmatprep.mubr.bf16.mxu0 0
        %1340 = vmatmul.mubr.bf16.gmra.mrb[0].mxu0 %v1155
        %v1341 = vpop.f32.mrb[0].mxu0
        %v1342 = vadd.f32 0.0, %v1341
        %v1343 = vpop.f32.mrb[0].mxu0
        %v1344 = vadd.f32 0.0, %v1343
        %v1345 = vpop.f32.mrb[0].mxu0
        %v1346 = vpop.f32.mrb[0].mxu0
        %1347 = vmatprep.mubr.bf16.mxu0 0
        %1348 = vmatmul.mubr.bf16.gmra.mrb[0].mxu0 %v1158
        %v1349 = vpop.f32.mrb[0].mxu0
        %v1350 = vadd.f32 0.0, %v1349
        %v1351 = vpop.f32.mrb[0].mxu0
        %v1352 = vadd.f32 0.0, %v1351
        %v1353 = vpop.f32.mrb[0].mxu0
        %v1354 = vpop.f32.mrb[0].mxu0
        %1355 = vmatprep.mubr.bf16.mxu0 0
        %1356 = vmatmul.mubr.bf16.gmra.mrb[0].mxu0 %v1161
        %v1357 = vpop.f32.mrb[0].mxu0
        %v1358 = vadd.f32 0.0, %v1357
        %v1359 = vpop.f32.mrb[0].mxu0
        %v1360 = vadd.f32 0.0, %v1359
        %v1361 = vpop.f32.mrb[0].mxu0
        %v1362 = vpop.f32.mrb[0].mxu0
        %1363 = vmatprep.mubr.bf16.mxu0 0
        %1364 = vmatmul.mubr.bf16.gmra.mrb[0].mxu0 %v1164
        %v1365 = vpop.f32.mrb[0].mxu0
        %v1366 = vadd.f32 0.0, %v1365
        %v1367 = vpop.f32.mrb[0].mxu0
        %v1368 = vadd.f32 0.0, %v1367
        %v1369 = vpop.f32.mrb[0].mxu0
        %v1370 = vadd.f32 0.0, %v1369
        %v1371 = vpop.f32.mrb[0].mxu0
        %v1372 = vadd.f32 0.0, %v1371
        %1373 = vmatprep.mubr.bf16.mxu0 0
        %1374 = vmatmul.mubr.bf16.gmra.mrb[0].mxu0 %v1167
        %v1375 = vpop.f32.mrb[0].mxu0
        %v1376 = vadd.f32 0.0, %v1375
        %v1377 = vpop.f32.mrb[0].mxu0
        %v1378 = vadd.f32 0.0, %v1377
        %v1379 = vpop.f32.mrb[0].mxu0
        %v1380 = vadd.f32 0.0, %v1379
        %v1381 = vpop.f32.mrb[0].mxu0
        %v1382 = vadd.f32 0.0, %v1381
        %1383 = vmatprep.mubr.bf16.mxu0 0
        %1384 = vmatmul.mubr.bf16.gmra.mrb[0].mxu0 %v1170
        %v1385 = vpop.f32.mrb[0].mxu0
        %v1386 = vadd.f32 0.0, %v1385
        %v1387 = vpop.f32.mrb[0].mxu0
        %v1388 = vadd.f32 0.0, %v1387
        %v1389 = vpop.f32.mrb[0].mxu0
        %v1390 = vadd.f32 0.0, %v1389
        %v1391 = vpop.f32.mrb[0].mxu0
        %v1392 = vadd.f32 0.0, %v1391
        %1393 = vdwg.mxu0
        %s1394 = scalar_lea.vmem %s4, 64
        %v1395 = vld [vmem:[%s1394] sm:$0xff]
        %1396 = vrot.lane.b32.xlu0 %v1207, 1
        %v1397 = vpop.permute.xlu0 %1396
        %1398 = vrot.lane.b32.xlu0 %v1209, 1
        %v1399 = vpop.permute.xlu0 %1398
        %1400 = vrot.lane.b32.xlu0 %v1318, 1
        %v1401 = vpop.permute.xlu0 %1400
        %1402 = vrot.lane.b32.xlu0 %v1320, 1
        %v1403 = vpop.permute.xlu0 %1402
        %v1404 = vsel %vm729, %v1401, %v1403
        %v1405 = vsel %vm729, %v1399, %v1401
        %v1406 = vsel %vm729, %v1397, %v1399
        %v1407 = vsel %vm729, %v1403, %v1397
        %v1408 = vadd.f32 %v1215, %v1407
        %v1409 = vadd.f32 %v1217, %v1406
        %v1410 = vadd.f32 %v1326, %v1405
        %v1411 = vadd.f32 %v1328, %v1404
        %1412 = vrot.lane.b32.xlu0 %v1223, 127
        %v1413 = vpop.permute.xlu0 %1412
        %1414 = vrot.lane.b32.xlu0 %v1225, 127
        %v1415 = vpop.permute.xlu0 %1414
        %1416 = vrot.lane.b32.xlu0 %v1334, 127
        %v1417 = vpop.permute.xlu0 %1416
        %1418 = vrot.lane.b32.xlu0 %v1336, 127
        %v1419 = vpop.permute.xlu0 %1418
        %v1420 = vsel %vm746, %v1417, %v1419
        %v1421 = vsel %vm746, %v1415, %v1417
        %v1422 = vsel %vm746, %v1413, %v1415
        %v1423 = vsel %vm746, %v1419, %v1413
        %v1424 = vadd.f32 %v1408, %v1422
        %v1425 = vadd.f32 %v1409, %v1421
        %v1426 = vadd.f32 %v1410, %v1420
        %v1427 = vadd.f32 %v1411, %v1423
        %1429 = vset.pattern.permute.xlu0 0
        %1430 = vperm.xlu0 %1429, %v1395
        %v1431 = vpop.permute.xlu0 %1430
        %v1433 = vadd.f32 %v1424, %v1431
        %v1434 = vadd.f32 %v1425, %v1431
        %v1435 = vadd.f32 %v1426, %v1431
        %v1436 = vadd.f32 %v1427, %v1431
        %s1437 = scalar_lea.vmem %s4, 80
        %v1438 = vld [vmem:[%s1437] sm:$0xff]
        %1439 = vrot.lane.b32.xlu0 %v1231, 2
        %v1440 = vpop.permute.xlu0 %1439
        %1441 = vrot.lane.b32.xlu0 %v1233, 2
        %v1442 = vpop.permute.xlu0 %1441
        %1443 = vrot.lane.b32.xlu0 %v1342, 2
        %v1444 = vpop.permute.xlu0 %1443
        %1445 = vrot.lane.b32.xlu0 %v1344, 2
        %v1446 = vpop.permute.xlu0 %1445
        %v1447 = vsel %vm868, %v1444, %v1446
        %v1448 = vsel %vm868, %v1442, %v1444
        %v1449 = vsel %vm868, %v1440, %v1442
        %v1450 = vsel %vm868, %v1446, %v1440
        %v1451 = vadd.f32 %v1239, %v1450
        %v1452 = vadd.f32 %v1241, %v1449
        %v1453 = vadd.f32 %v1350, %v1448
        %v1454 = vadd.f32 %v1352, %v1447
        %1455 = vrot.lane.b32.xlu0 %v1247, 126
        %v1456 = vpop.permute.xlu0 %1455
        %1457 = vrot.lane.b32.xlu0 %v1249, 126
        %v1458 = vpop.permute.xlu0 %1457
        %1459 = vrot.lane.b32.xlu0 %v1358, 126
        %v1460 = vpop.permute.xlu0 %1459
        %1461 = vrot.lane.b32.xlu0 %v1360, 126
        %v1462 = vpop.permute.xlu0 %1461
        %v1463 = vsel %vm901, %v1460, %v1462
        %v1464 = vsel %vm901, %v1458, %v1460
        %v1465 = vsel %vm901, %v1456, %v1458
        %v1466 = vsel %vm901, %v1462, %v1456
        %v1467 = vadd.f32 %v1451, %v1465
        %v1468 = vadd.f32 %v1452, %v1464
        %v1469 = vadd.f32 %v1453, %v1463
        %v1470 = vadd.f32 %v1454, %v1466
        %1472 = vset.pattern.permute.xlu0 0
        %1473 = vperm.xlu0 %1472, %v1438
        %v1474 = vpop.permute.xlu0 %1473
        %v1476 = vadd.f32 %v1467, %v1474
        %v1477 = vadd.f32 %v1468, %v1474
        %v1478 = vadd.f32 %v1469, %v1474
        %v1479 = vadd.f32 %v1470, %v1474
        %s1480 = scalar_lea.vmem %s4, 96
        %v1481 = vld [vmem:[%s1480] sm:$0xff]
        %v1482 = vld [vmem:[%s1480 + $0x8] sm:$0xff]
        %1483 = vrot.lane.b32.xlu0 %v1255, 2
        %v1484 = vpop.permute.xlu0 %1483
        %1485 = vrot.lane.b32.xlu0 %v1259, 2
        %v1486 = vpop.permute.xlu0 %1485
        %1487 = vrot.lane.b32.xlu0 %v1257, 2
        %v1488 = vpop.permute.xlu0 %1487
        %1489 = vrot.lane.b32.xlu0 %v1261, 2
        %v1490 = vpop.permute.xlu0 %1489
        %1491 = vrot.lane.b32.xlu0 %v1366, 2
        %v1492 = vpop.permute.xlu0 %1491
        %1493 = vrot.lane.b32.xlu0 %v1370, 2
        %v1494 = vpop.permute.xlu0 %1493
        %1495 = vrot.lane.b32.xlu0 %v1368, 2
        %v1496 = vpop.permute.xlu0 %1495
        %1497 = vrot.lane.b32.xlu0 %v1372, 2
        %v1498 = vpop.permute.xlu0 %1497
        %v1499 = vsel %vm868, %v1492, %v1496
        %v1500 = vsel %vm868, %v1494, %v1498
        %v1501 = vsel %vm868, %v1488, %v1492
        %v1502 = vsel %vm868, %v1490, %v1494
        %v1503 = vsel %vm868, %v1484, %v1488
        %v1504 = vsel %vm868, %v1486, %v1490
        %v1505 = vsel %vm868, %v1496, %v1484
        %v1506 = vsel %vm868, %v1498, %v1486
        %v1507 = vadd.f32 %v1265, %v1505
        %v1508 = vadd.f32 %v1267, %v1503
        %v1509 = vadd.f32 %v1376, %v1501
        %v1510 = vadd.f32 %v1378, %v1499
        %v1511 = vadd.f32 %v1269, %v1506
        %v1512 = vadd.f32 %v1271, %v1504
        %v1513 = vadd.f32 %v1380, %v1502
        %v1514 = vadd.f32 %v1382, %v1500
        %1515 = vrot.lane.b32.xlu0 %v1275, 126
        %v1516 = vpop.permute.xlu0 %1515
        %1517 = vrot.lane.b32.xlu0 %v1279, 126
        %v1518 = vpop.permute.xlu0 %1517
        %1519 = vrot.lane.b32.xlu0 %v1277, 126
        %v1520 = vpop.permute.xlu0 %1519
        %1521 = vrot.lane.b32.xlu0 %v1281, 126
        %v1522 = vpop.permute.xlu0 %1521
        %1523 = vrot.lane.b32.xlu0 %v1386, 126
        %v1524 = vpop.permute.xlu0 %1523
        %1525 = vrot.lane.b32.xlu0 %v1390, 126
        %v1526 = vpop.permute.xlu0 %1525
        %1527 = vrot.lane.b32.xlu0 %v1388, 126
        %v1528 = vpop.permute.xlu0 %1527
        %1529 = vrot.lane.b32.xlu0 %v1392, 126
        %v1530 = vpop.permute.xlu0 %1529
        %v1531 = vsel %vm901, %v1524, %v1528
        %v1532 = vsel %vm901, %v1526, %v1530
        %v1533 = vsel %vm901, %v1520, %v1524
        %v1534 = vsel %vm901, %v1522, %v1526
        %v1535 = vsel %vm901, %v1516, %v1520
        %v1536 = vsel %vm901, %v1518, %v1522
        %v1537 = vsel %vm901, %v1528, %v1516
        %v1538 = vsel %vm901, %v1530, %v1518
        %v1539 = vadd.f32 %v1507, %v1535
        %v1540 = vadd.f32 %v1508, %v1533
        %v1541 = vadd.f32 %v1509, %v1531
        %v1542 = vadd.f32 %v1510, %v1537
        %v1543 = vadd.f32 %v1511, %v1536
        %v1544 = vadd.f32 %v1512, %v1534
        %v1545 = vadd.f32 %v1513, %v1532
        %v1546 = vadd.f32 %v1514, %v1538
        %1548 = vset.pattern.permute.xlu0 0
        %1549 = vperm.xlu0 %1548, %v1481
        %v1550 = vpop.permute.xlu0 %1549
        %1553 = vset.pattern.permute.xlu0 0
        %1554 = vperm.xlu0 %1553, %v1482
        %v1555 = vpop.permute.xlu0 %1554
        %v1557 = vadd.f32 %v1539, %v1550
        %v1558 = vadd.f32 %v1540, %v1550
        %v1559 = vadd.f32 %v1541, %v1550
        %v1560 = vadd.f32 %v1542, %v1550
        %v1561 = vadd.f32 %v1543, %v1555
        %v1562 = vadd.f32 %v1544, %v1555
        %v1563 = vadd.f32 %v1545, %v1555
        %v1564 = vadd.f32 %v1546, %v1555
        %v1565 = vld [vmem:[%s3] sm:$0xf]
        %v1566 = vld [vmem:[%s3 + $0x4] sm:$0xf]
        %v1567 = vld [vmem:[%s3 + $0x8] sm:$0xf]
        %v1568 = vld [vmem:[%s3 + $0xc] sm:$0xf]
        %v1569 = vld [vmem:[%s3 + $0x10] sm:$0xf]
        %v1570 = vld [vmem:[%s3 + $0x14] sm:$0xf]
        %v1571 = vsel %vm281, %v1557, 0.0
        %v1572 = vsel %vm282, %v1558, 0.0
        %v1573 = vsel %vm283, %v1559, 0.0
        %v1574 = vsel %vm284, %v1560, 0.0
        %v1575 = vsel %vm281, %v1561, 0.0
        %v1576 = vsel %vm282, %v1562, 0.0
        %v1577 = vsel %vm283, %v1563, 0.0
        %v1578 = vsel %vm284, %v1564, 0.0
        %v1579 = vpack.c.bf16 %v1575, %v1571
        %v1580 = vpack.c.bf16 %v1576, %v1572
        %v1581 = vpack.c.bf16 %v1577, %v1573
        %v1582 = vpack.c.bf16 %v1578, %v1574
        %v1589 = vunpack.c.l.b16 %v1565
        %v1590 = vunpack.c.l.b16 %v1566
        %v1591 = vunpack.c.l.b16 %v1567
        %v1592 = vunpack.c.l.b16 %v1568
        %v1593 = vunpack.c.l.b16 %v1569
        %v1594 = vunpack.c.l.b16 %v1570
        %v1595 = vpack.c.b16 %v1590, %v1589
        %v1596 = vpack.c.b16 %v1592, %v1591
        %v1597 = vpack.c.b16 %v1594, %v1593
        %v1599 = vsel %vm389, %v1595, 0
        %v1602 = vsel %vm389, %v1596, 0
        %v1605 = vsel %vm389, %v1597, 0
        %1607 = vmatprep.subr.bf16.mxu0 %v1580
        %1608 = vmatpush1.bf16.msra.mxu0 %v1579
        %1609 = vmatprep.subr.bf16.mxu0 0
        %1610 = vmatpush1.bf16.msra.mxu0 0
        %1611 = vmatprep.subr.bf16.mxu0 0
        %1612 = vmatpush1.bf16.msra.mxu0 0
        %1613 = vmatprep.subr.bf16.mxu0 0
        %1614 = vmatpush1.bf16.msra.mxu0 0
        %1615 = vmatprep.subr.bf16.mxu0 0
        %1616 = vmatpush1.bf16.msra.mxu0 0
        %1617 = vmatprep.subr.bf16.mxu0 0
        %1618 = vmatpush1.bf16.msra.mxu0 0
        %1619 = vmatprep.subr.bf16.mxu0 0
        %1620 = vmatpush1.bf16.msra.mxu0 0
        %1621 = vmatprep.subr.bf16.mxu0 0
        %1622 = vmatpush1.bf16.msra.mxu0 0
        %1623 = vmatprep.subr.bf16.mxu0 0
        %1624 = vmatpush1.bf16.msra.mxu0 0
        %1625 = vmatprep.subr.bf16.mxu0 0
        %1626 = vmatpush1.bf16.msra.mxu0 0
        %1627 = vmatprep.subr.bf16.mxu0 0
        %1628 = vmatpush1.bf16.msra.mxu0 0
        %1629 = vmatprep.subr.bf16.mxu0 0
        %1630 = vmatpush1.bf16.msra.mxu0 0
        %1631 = vmatprep.subr.bf16.mxu0 0
        %1632 = vmatpush1.bf16.msra.mxu0 0
        %1633 = vmatprep.subr.bf16.mxu0 0
        %1634 = vmatpush1.bf16.msra.mxu0 0
        %1635 = vmatprep.subr.bf16.mxu0 0
        %1636 = vmatpush1.bf16.msra.mxu0 0
        %1637 = vmatprep.subr.bf16.mxu0 0
        %1638 = vmatpush1.bf16.msra.mxu0 0
        %1639 = vmatprep.mubr.bf16.mxu0 0
        %1640 = vmatmul.mubr.bf16.gmra.mrb[0].mxu0 %v1599
        %v1641 = vpop.f32.mrb[0].mxu0
        %v1642 = vadd.f32 0.0, %v1641
        %v1643 = vpop.f32.mrb[0].mxu0
        %v1644 = vadd.f32 0.0, %v1643
        %v1645 = vpop.f32.mrb[0].mxu0
        %v1646 = vpop.f32.mrb[0].mxu0
        %1647 = vmatprep.mubr.bf16.mxu0 0
        %1648 = vmatmul.mubr.bf16.gmra.mrb[0].mxu0 %v1602
        %v1649 = vpop.f32.mrb[0].mxu0
        %v1650 = vadd.f32 0.0, %v1649
        %v1651 = vpop.f32.mrb[0].mxu0
        %v1652 = vadd.f32 0.0, %v1651
        %v1653 = vpop.f32.mrb[0].mxu0
        %v1654 = vpop.f32.mrb[0].mxu0
        %1655 = vmatprep.mubr.bf16.mxu0 0
        %1656 = vmatmul.mubr.bf16.gmra.mrb[0].mxu0 %v1605
        %v1657 = vpop.f32.mrb[0].mxu0
        %v1658 = vadd.f32 0.0, %v1657
        %v1659 = vpop.f32.mrb[0].mxu0
        %v1660 = vadd.f32 0.0, %v1659
        %v1661 = vpop.f32.mrb[0].mxu0
        %v1662 = vpop.f32.mrb[0].mxu0
        %1663 = vdwg.mxu0
        %1664 = vmatprep.subr.bf16.mxu0 %v1582
        %1665 = vmatpush1.bf16.msra.mxu0 %v1581
        %1666 = vmatprep.subr.bf16.mxu0 0
        %1667 = vmatpush1.bf16.msra.mxu0 0
        %1668 = vmatprep.subr.bf16.mxu0 0
        %1669 = vmatpush1.bf16.msra.mxu0 0
        %1670 = vmatprep.subr.bf16.mxu0 0
        %1671 = vmatpush1.bf16.msra.mxu0 0
        %1672 = vmatprep.subr.bf16.mxu0 0
        %1673 = vmatpush1.bf16.msra.mxu0 0
        %1674 = vmatprep.subr.bf16.mxu0 0
        %1675 = vmatpush1.bf16.msra.mxu0 0
        %1676 = vmatprep.subr.bf16.mxu0 0
        %1677 = vmatpush1.bf16.msra.mxu0 0
        %1678 = vmatprep.subr.bf16.mxu0 0
        %1679 = vmatpush1.bf16.msra.mxu0 0
        %1680 = vmatprep.subr.bf16.mxu0 0
        %1681 = vmatpush1.bf16.msra.mxu0 0
        %1682 = vmatprep.subr.bf16.mxu0 0
        %1683 = vmatpush1.bf16.msra.mxu0 0
        %1684 = vmatprep.subr.bf16.mxu0 0
        %1685 = vmatpush1.bf16.msra.mxu0 0
        %1686 = vmatprep.subr.bf16.mxu0 0
        %1687 = vmatpush1.bf16.msra.mxu0 0
        %1688 = vmatprep.subr.bf16.mxu0 0
        %1689 = vmatpush1.bf16.msra.mxu0 0
        %1690 = vmatprep.subr.bf16.mxu0 0
        %1691 = vmatpush1.bf16.msra.mxu0 0
        %1692 = vmatprep.subr.bf16.mxu0 0
        %1693 = vmatpush1.bf16.msra.mxu0 0
        %1694 = vmatprep.subr.bf16.mxu0 0
        %1695 = vmatpush1.bf16.msra.mxu0 0
        %1696 = vmatprep.mubr.bf16.mxu0 0
        %1697 = vmatmul.mubr.bf16.gmra.mrb[0].mxu0 %v1599
        %v1698 = vpop.f32.mrb[0].mxu0
        %v1699 = vadd.f32 0.0, %v1698
        %v1700 = vpop.f32.mrb[0].mxu0
        %v1701 = vadd.f32 0.0, %v1700
        %v1702 = vpop.f32.mrb[0].mxu0
        %v1703 = vpop.f32.mrb[0].mxu0
        %1704 = vmatprep.mubr.bf16.mxu0 0
        %1705 = vmatmul.mubr.bf16.gmra.mrb[0].mxu0 %v1602
        %v1706 = vpop.f32.mrb[0].mxu0
        %v1707 = vadd.f32 0.0, %v1706
        %v1708 = vpop.f32.mrb[0].mxu0
        %v1709 = vadd.f32 0.0, %v1708
        %v1710 = vpop.f32.mrb[0].mxu0
        %v1711 = vpop.f32.mrb[0].mxu0
        %1712 = vmatprep.mubr.bf16.mxu0 0
        %1713 = vmatmul.mubr.bf16.gmra.mrb[0].mxu0 %v1605
        %v1714 = vpop.f32.mrb[0].mxu0
        %v1715 = vadd.f32 0.0, %v1714
        %v1716 = vpop.f32.mrb[0].mxu0
        %v1717 = vadd.f32 0.0, %v1716
        %v1718 = vpop.f32.mrb[0].mxu0
        %v1719 = vpop.f32.mrb[0].mxu0
        %1720 = vdwg.mxu0
        %s1721 = scalar_lea.vmem %s4, 112
        %v1722 = vld [vmem:[%s1721] sm:$0xff]
        %1723 = vrot.lane.b32.xlu0 %v1642, 2
        %v1724 = vpop.permute.xlu0 %1723
        %1725 = vrot.lane.b32.xlu0 %v1644, 2
        %v1726 = vpop.permute.xlu0 %1725
        %1727 = vrot.lane.b32.xlu0 %v1699, 2
        %v1728 = vpop.permute.xlu0 %1727
        %1729 = vrot.lane.b32.xlu0 %v1701, 2
        %v1730 = vpop.permute.xlu0 %1729
        %v1731 = vsel %vm868, %v1728, %v1730
        %v1732 = vsel %vm868, %v1726, %v1728
        %v1733 = vsel %vm868, %v1724, %v1726
        %v1734 = vsel %vm868, %v1730, %v1724
        %v1735 = vadd.f32 %v1650, %v1734
        %v1736 = vadd.f32 %v1652, %v1733
        %v1737 = vadd.f32 %v1707, %v1732
        %v1738 = vadd.f32 %v1709, %v1731
        %1739 = vrot.lane.b32.xlu0 %v1658, 126
        %v1740 = vpop.permute.xlu0 %1739
        %1741 = vrot.lane.b32.xlu0 %v1660, 126
        %v1742 = vpop.permute.xlu0 %1741
        %1743 = vrot.lane.b32.xlu0 %v1715, 126
        %v1744 = vpop.permute.xlu0 %1743
        %1745 = vrot.lane.b32.xlu0 %v1717, 126
        %v1746 = vpop.permute.xlu0 %1745
        %v1747 = vsel %vm901, %v1744, %v1746
        %v1748 = vsel %vm901, %v1742, %v1744
        %v1749 = vsel %vm901, %v1740, %v1742
        %v1750 = vsel %vm901, %v1746, %v1740
        %v1751 = vadd.f32 %v1735, %v1749
        %v1752 = vadd.f32 %v1736, %v1748
        %v1753 = vadd.f32 %v1737, %v1747
        %v1754 = vadd.f32 %v1738, %v1750
        %1756 = vset.pattern.permute.xlu0 0
        %1757 = vperm.xlu0 %1756, %v1722
        %v1758 = vpop.permute.xlu0 %1757
        %v1760 = vadd.f32 %v1751, %v1758
        %v1761 = vadd.f32 %v1752, %v1758
        %v1762 = vadd.f32 %v1753, %v1758
        %v1763 = vadd.f32 %v1754, %v1758
        %v1764 = vmax.f32 %v760, 0.0
        %v1765 = vmax.f32 %v761, 0.0
        %v1766 = vmax.f32 %v762, 0.0
        %v1767 = vmax.f32 %v763, 0.0
        %1768 = vst [vmem:[%s217] sm:$0xff] %v1764
        %1769 = vst [vmem:[%s217 + $0x8] sm:$0xff] %v1765
        %1770 = vst [vmem:[%s217 + $0x10] sm:$0xff] %v1766
        %1771 = vst [vmem:[%s217 + $0x18] sm:$0xff] %v1767
        %v1772 = vmax.f32 %v1433, 0.0
        %v1773 = vmax.f32 %v1434, 0.0
        %v1774 = vmax.f32 %v1435, 0.0
        %v1775 = vmax.f32 %v1436, 0.0
        %1776 = vst [vmem:[%s217 + $0x20] sm:$0xff] %v1772
        %1777 = vst [vmem:[%s217 + $0x28] sm:$0xff] %v1773
        %1778 = vst [vmem:[%s217 + $0x30] sm:$0xff] %v1774
        %1779 = vst [vmem:[%s217 + $0x38] sm:$0xff] %v1775
        %v1780 = vmax.f32 %v1476, 0.0
        %v1781 = vmax.f32 %v1477, 0.0
        %v1782 = vmax.f32 %v1478, 0.0
        %v1783 = vmax.f32 %v1479, 0.0
        %1784 = vst [vmem:[%s217 + $0x40] sm:$0xff] %v1780
        %1785 = vst [vmem:[%s217 + $0x48] sm:$0xff] %v1781
        %1786 = vst [vmem:[%s217 + $0x50] sm:$0xff] %v1782
        %1787 = vst [vmem:[%s217 + $0x58] sm:$0xff] %v1783
        %v1788 = vmax.f32 %v1760, 0.0
        %v1789 = vmax.f32 %v1761, 0.0
        %v1790 = vmax.f32 %v1762, 0.0
        %v1791 = vmax.f32 %v1763, 0.0
        %1792 = vst [vmem:[%s217 + $0x60] sm:$0xff] %v1788
        %1793 = vst [vmem:[%s217 + $0x68] sm:$0xff] %v1789
        %1794 = vst [vmem:[%s217 + $0x70] sm:$0xff] %v1790
        %1795 = vst [vmem:[%s217 + $0x78] sm:$0xff] %v1791
        %s1796 = sand.u32 %s137, 1
        %s1797 = scalar_lea.sflag [#allocation4], %s1796
        %s1798 = sand.u32 %s137, 1
        %s1799 = smul.addr %s1798, 128
        %s1800 = scalar_lea.vmem [#allocation3], %s1799
        // Predicated region
        $region41: #{tpu_custom_call.1} parent=39 // pred_check
          %p1801 = pneg %p147
        $region42: #{tpu_custom_call.1} parent=39 // pred_check_branch
          %1803 = sbr.rel (%p1801) target = $region44
        $region43: #{tpu_custom_call.1} parent=39 // pred_region
          %s1805 = ssub.s32 2048, 2048
          %1806 = vsyncadd %s1797, %s1805
          %s1807 = smul.addr %s19, 16
          %s1808 = smul.addr %s1807, 128
          %s1809 = scalar_lea.hbm %s5, %s1808
          %s1810 = sshll.u32 %s1800, 4
          %s1811 = int_to_ptr.vmem [resolvable:$true] %s1810
          %1816 = dma.vmem_to_hbm [thread:$0]  %s1811, 2048, %s1809, %s1797, 512, 512, 32
        $region44: #{tpu_custom_call.1} parent=39 // pred_fallthru
          _
      $region40: #{tpu_custom_call.1} parent=5 // pred_fallthru
        _
      %p1817 = scmp.le.s32.totalorder 2, %s14
      // Predicated region
      $region45: #{tpu_custom_call.1} parent=5 // pred_check
        %p1818 = pneg %p1817
      $region46: #{tpu_custom_call.1} parent=5 // pred_check_branch
        %1820 = sbr.rel (%p1818) target = $region48
      $region47: #{tpu_custom_call.1} parent=5 // pred_region
        %s1821 = ssub.s32 %s14, 2
        // Predicated region
        $region49: #{tpu_custom_call.1} parent=47 // pred_check
          %p1822 = pneg %p153
        $region50: #{tpu_custom_call.1} parent=47 // pred_check_branch
          %1824 = sbr.rel (%p1822) target = $region52
        $region51: #{tpu_custom_call.1} parent=47 // pred_region
          %s1825 = sand.u32 %s138, 1
          %s1826 = scalar_lea.sflag [#allocation4], %s1825
          %s1827 = sand.u32 %s138, 1
          %s1828 = smul.addr %s1827, 128
          %s1829 = scalar_lea.vmem [#allocation3], %s1828
          %1830 = dma.done %s1826, 2048
        $region52: #{tpu_custom_call.1} parent=47 // pred_fallthru
          _
      $region48: #{tpu_custom_call.1} parent=5 // pred_fallthru
        _
    $region6: #{tpu_custom_call.1} parent=1 // loop_footer
      %s18 = sadd.s32 1, %s14
    $region7: #{tpu_custom_call.1} parent=1 // loop_footer_branch
      %13 = sbr.rel target = $region3
    $region8: #{tpu_custom_call.1} parent=1 // loop_exit
      _
    %1831 = vsyncpa [#allocation4], 1
    %s1832 = scalar_lea.sflag [#allocation4], 1
    %1833 = vsyncpa %s1832, 1

</llo_original>
